<compile_context>
chip_gen: v7x
topology: tpu7x:2x2x1
jax: 0.10.0
libtpu: 0.0.40
codegen_flags: <defaults>
</compile_context>

<pallas_src>
import functools

import jax
import jax.numpy as jnp
from jax.experimental import pallas as pl
from jax.experimental.pallas import tpu as pltpu

LANE = 128


def _round_up(n, m):
    return ((n + m - 1) // m) * m


def _default_bf16_activations():
    """bf16 VPU path exists on v6e/v7x; keep f32 activations on older chips (v5e)."""
    try:
        kind = jax.devices()[0].device_kind.lower()
    except Exception:
        return False
    return ("v6" in kind) or ("v7" in kind)


def _generic_block_kernel(
    x_ref,
    w1_ref, b1_ref,
    w2_ref, b2_ref,
    w3_ref, b3_ref,
    w4_ref, b4_ref,
    wt_ref, bt_ref,      # fused theta heads, one 128-lane slab  [Up, 128]
    wo_ref, bo_ref,      # fused block-structured backcast|forecast projection [128, 128]
    out_ref,
    *, bf16_activations,
):
    act_dtype = jnp.bfloat16 if bf16_activations else jnp.float32

    def dense(h, w_ref, b_ref, relu=True, out_dtype=jnp.float32):
        # bf16 operands on the MXU, f32 accumulation; bias + ReLU in f32 on the VPU.
        y = jnp.dot(h.astype(w_ref.dtype), w_ref[...],
                    preferred_element_type=jnp.float32) + b_ref[...]
        if relu:
            y = jnp.maximum(y, 0.0)
        return y.astype(out_dtype)

    # Block.forward: 4 x (Linear + ReLU); dropouts are identity (eval mode).
    h = dense(x_ref[...], w1_ref, b1_ref, out_dtype=act_dtype)
    h = dense(h, w2_ref, b2_ref, out_dtype=act_dtype)
    h = dense(h, w3_ref, b3_ref, out_dtype=act_dtype)
    h = dense(h, w4_ref, b4_ref, out_dtype=act_dtype)

    # GenericBlock.forward: both theta heads (ReLU) in one matmul over a single
    # 128-lane slab, then backcast/forecast as one block-structured matmul (no ReLU).
    theta = dense(h, wt_ref, bt_ref, out_dtype=act_dtype)              # [TB, 128]
    out = dense(theta, wo_ref, bo_ref, relu=False, out_dtype=out_ref.dtype)  # [TB, 128]

    out_ref[...] = out


def pack_params(params, backcast_length, forecast_length, units, thetas_dim):
    """Pack weights into a compact, lane-dense layout and cast matmul weights to bf16
    (biases stay f32).  Theta heads and backcast/forecast projections are fused into
    single 128-lane slabs."""
    Up = _round_up(units, LANE)
    T = thetas_dim
    THW = LANE    # compact theta slab: [theta_b | theta_f | 0 ...]
    OUTW = LANE   # compact output slab: [backcast | forecast | 0 ...]
    assert 2 * T <= THW, "compact theta layout requires 2*thetas_dim <= 128"
    assert backcast_length + forecast_length <= OUTW, \
        "compact output layout requires backcast_length + forecast_length <= 128"

    def pad2(a, r, c):
        return jnp.pad(a, ((0, r - a.shape[0]), (0, c - a.shape[1])))

    packed = {}
    # fc1: keep K (input width) unpadded; pad output lanes to Up.
    packed["w1"] = pad2(params["w1"], backcast_length, Up).astype(jnp.bfloat16)
    packed["b1"] = pad2(params["b1"], 1, Up)
    for wn, bn in (("w2", "b2"), ("w3", "b3"), ("w4", "b4")):
        packed[wn] = pad2(params[wn], Up, Up).astype(jnp.bfloat16)
        packed[bn] = pad2(params[bn], 1, Up)

    # Fused theta heads -> one [Up, 128] slab (padded lanes are exactly zero).
    wt = jnp.zeros((Up, THW), jnp.float32)
    wt = wt.at[:units, 0:T].set(params["wtb"])
    wt = wt.at[:units, T:2 * T].set(params["wtf"])
    packed["wt"] = wt.astype(jnp.bfloat16)
    bt = jnp.zeros((1, THW), jnp.float32)
    bt = bt.at[:, 0:T].set(params["btb"])
    bt = bt.at[:, T:2 * T].set(params["btf"])
    packed["bt"] = bt

    # Fused block-structured output projection -> one [128, 128] slab.
    #   rows [0:T)   (theta_b lanes) feed cols [0:backcast_length)
    #   rows [T:2T)  (theta_f lanes) feed cols [backcast_length:backcast_length+forecast_length)
    wo = jnp.zeros((THW, OUTW), jnp.float32)
    wo = wo.at[0:T, 0:backcast_length].set(params["wbc"])
    wo = wo.at[T:2 * T, backcast_length:backcast_length + forecast_length].set(params["wfc"])
    packed["wo"] = wo.astype(jnp.bfloat16)
    bo = jnp.zeros((1, OUTW), jnp.float32)
    bo = bo.at[:, 0:backcast_length].set(params["bbc"])
    bo = bo.at[:, backcast_length:backcast_length + forecast_length].set(params["bfc"])
    packed["bo"] = bo
    return packed


def _vmem_limit_bytes(TB, weight_args):
    """Budget VMEM from actual block sizes (stays well under v7x's 64 MiB/core)."""
    w_bytes = sum(int(a.size) * a.dtype.itemsize for a in weight_args)
    x_blk = TB * LANE * 2        # bf16 x block (lane-padded on chip)
    o_blk = TB * LANE * 4        # f32 output slab block
    interm = 6 * TB * LANE * 4   # generous: h chain / theta / out temporaries in f32
    total = 2 * (x_blk + o_blk) + 2 * w_bytes + interm
    return int(min(max(2 * total, 16 * 1024 * 1024), 48 * 1024 * 1024))


def generic_block_forward(x, packed, backcast_length, forecast_length,
                          batch_tile=None, bf16_activations=None):
    """x: [B, backcast_length] f32.  packed: output of pack_params.
    Returns (backcast [B, backcast_length], forecast [B, forecast_length]) in f32."""
    B, K = x.shape
    assert K == backcast_length
    OUTW = packed["wo"].shape[1]

    if bf16_activations is None:
        bf16_activations = _default_bf16_activations()

    # Large batch tiles amortize the ~0.35us/step overhead; always >= 2 grid steps so
    # the "parallel" batch axis shards across both TensorCores on v7x (harmless on 1-TC chips).
    if batch_tile is None:
        TB = min(2048, max(8, _round_up((B + 1) // 2, 8)))
    else:
        TB = _round_up(batch_tile, 8)
    B_p = _round_up(B, TB)
    n_tiles = B_p // TB

    # Pad ONLY the batch dim; cast to bf16 here (MXU operand dtype) to halve x HBM traffic.
    x_p = jnp.pad(x.astype(jnp.bfloat16), ((0, B_p - B), (0, 0)))

    def resident(a):  # full-shape, block index never changes -> VMEM-resident across grid
        return pl.BlockSpec(a.shape, lambda i: (0, 0))

    arg_names = ("w1", "b1", "w2", "b2", "w3", "b3", "w4", "b4", "wt", "bt", "wo", "bo")
    weight_args = tuple(packed[n] for n in arg_names)

    kernel = functools.partial(_generic_block_kernel, bf16_activations=bf16_activations)

    out = pl.pallas_call(
        kernel,
        out_shape=jax.ShapeDtypeStruct((B_p, OUTW), jnp.float32),
        grid=(n_tiles,),
        in_specs=[pl.BlockSpec((TB, K), lambda i: (i, 0))]
                 + [resident(a) for a in weight_args],
        out_specs=pl.BlockSpec((TB, OUTW), lambda i: (i, 0)),
        compiler_params=pltpu.CompilerParams(
            dimension_semantics=("parallel",),
            vmem_limit_bytes=_vmem_limit_bytes(TB, weight_args),
        ),
    )(x_p, *weight_args)

    backcast = out[:B, :backcast_length]
    forecast = out[:B, backcast_length:backcast_length + forecast_length]
    return backcast, forecast


def _init_linear(key, in_features, out_features):
    """PyTorch-style init U(-1/sqrt(in), 1/sqrt(in)); weight pre-transposed to [in, out]."""
    kw, kb = jax.random.split(key)
    bound = 1.0 / (in_features ** 0.5)
    w = jax.random.uniform(kw, (in_features, out_features), jnp.float32, -bound, bound)
    b = jax.random.uniform(kb, (1, out_features), jnp.float32, -bound, bound)
    return w, b


def make_params(key, backcast_length, forecast_length, units, thetas_dim):
    keys = jax.random.split(key, 8)
    p = {}
    p["w1"], p["b1"] = _init_linear(keys[0], backcast_length, units)
    p["w2"], p["b2"] = _init_linear(keys[1], units, units)
    p["w3"], p["b3"] = _init_linear(keys[2], units, units)
    p["w4"], p["b4"] = _init_linear(keys[3], units, units)
    p["wtb"], p["btb"] = _init_linear(keys[4], units, thetas_dim)
    p["wtf"], p["btf"] = _init_linear(keys[5], units, thetas_dim)
    p["wbc"], p["bbc"] = _init_linear(keys[6], thetas_dim, backcast_length)
    p["wfc"], p["bfc"] = _init_linear(keys[7], thetas_dim, forecast_length)
    return p


def reference_forward(x, p):
    """Pure-JAX reference with the same numeric path (bf16 MXU operands, f32 accumulate,
    eval-mode dropout = identity)."""
    def dense(h, w, b, relu=True):
        y = jnp.dot(h.astype(jnp.bfloat16), w.astype(jnp.bfloat16),
                    preferred_element_type=jnp.float32) + b
        return jnp.maximum(y, 0.0) if relu else y

    h = dense(x, p["w1"], p["b1"])
    h = dense(h, p["w2"], p["b2"])
    h = dense(h, p["w3"], p["b3"])
    h = dense(h, p["w4"], p["b4"])
    tb = dense(h, p["wtb"], p["btb"])
    tf = dense(h, p["wtf"], p["btf"])
    backcast = dense(tb, p["wbc"], p["bbc"], relu=False)
    forecast = dense(tf, p["wfc"], p["bfc"], relu=False)
    return backcast, forecast


if __name__ == "__main__":
    # Module-default feature dims; batch=256 with the default tile selection gives
    # TB=128 and a 2-step "parallel" batch grid (exercises multi-tile + megacore path).
    batch = 256
    backcast_length = 10
    forecast_length = 5
    units = 32
    thetas_dim = 8

    key = jax.random.PRNGKey(0)
    k_x, k_p = jax.random.split(key)

    x = jax.random.normal(k_x, (batch, backcast_length), jnp.float32)
    params = make_params(k_p, backcast_length, forecast_length, units, thetas_dim)
    packed = pack_params(params, backcast_length, forecast_length, units, thetas_dim)

    fwd = jax.jit(
        functools.partial(
            generic_block_forward,
            backcast_length=backcast_length,
            forecast_length=forecast_length,
        )
    )
    backcast, forecast = fwd(x, packed)
    jax.block_until_ready((backcast, forecast))

    ref_b, ref_f = reference_forward(x, params)
    assert backcast.shape == (batch, backcast_length)
    assert forecast.shape == (batch, forecast_length)
    assert jnp.allclose(backcast, ref_b, atol=1e-3, rtol=1e-3)
    assert jnp.allclose(forecast, ref_f, atol=1e-3, rtol=1e-3)

    print("KERNEL_OK")
</pallas_src>

<mosaic_0001>
module attributes {stable_mosaic.version = 11 : i64} {
  func.func @_generic_block_kernel(%arg0: i32, %arg1: memref<128x10xbf16, #tpu.memory_space<vmem>>, %arg2: memref<10x128xbf16, #tpu.memory_space<vmem>>, %arg3: memref<1x128xf32, #tpu.memory_space<vmem>>, %arg4: memref<128x128xbf16, #tpu.memory_space<vmem>>, %arg5: memref<1x128xf32, #tpu.memory_space<vmem>>, %arg6: memref<128x128xbf16, #tpu.memory_space<vmem>>, %arg7: memref<1x128xf32, #tpu.memory_space<vmem>>, %arg8: memref<128x128xbf16, #tpu.memory_space<vmem>>, %arg9: memref<1x128xf32, #tpu.memory_space<vmem>>, %arg10: memref<128x128xbf16, #tpu.memory_space<vmem>>, %arg11: memref<1x128xf32, #tpu.memory_space<vmem>>, %arg12: memref<128x128xbf16, #tpu.memory_space<vmem>>, %arg13: memref<1x128xf32, #tpu.memory_space<vmem>>, %arg14: memref<128x128xf32, #tpu.memory_space<vmem>>) attributes {dimension_semantics = [#tpu.dimension_semantics<parallel>], iteration_bounds = array<i64: 2>, scalar_prefetch = 0 : i64, scratch_operands = 0 : i64, tpu.core_type = #tpu.core_type<tc>, window_params = [{transform_indices = @transform_0, window_bounds = array<i64: 128, 10>}, {pipeline_mode = #tpu.pipeline_mode<synchronous>, transform_indices = @transform_1, window_bounds = array<i64: 10, 128>}, {pipeline_mode = #tpu.pipeline_mode<synchronous>, transform_indices = @transform_2, window_bounds = array<i64: 1, 128>}, {pipeline_mode = #tpu.pipeline_mode<synchronous>, transform_indices = @transform_3, window_bounds = array<i64: 128, 128>}, {pipeline_mode = #tpu.pipeline_mode<synchronous>, transform_indices = @transform_4, window_bounds = array<i64: 1, 128>}, {pipeline_mode = #tpu.pipeline_mode<synchronous>, transform_indices = @transform_5, window_bounds = array<i64: 128, 128>}, {pipeline_mode = #tpu.pipeline_mode<synchronous>, transform_indices = @transform_6, window_bounds = array<i64: 1, 128>}, {pipeline_mode = #tpu.pipeline_mode<synchronous>, transform_indices = @transform_7, window_bounds = array<i64: 128, 128>}, {pipeline_mode = #tpu.pipeline_mode<synchronous>, transform_indices = @transform_8, window_bounds = array<i64: 1, 128>}, {pipeline_mode = #tpu.pipeline_mode<synchronous>, transform_indices = @transform_9, window_bounds = array<i64: 128, 128>}, {pipeline_mode = #tpu.pipeline_mode<synchronous>, transform_indices = @transform_10, window_bounds = array<i64: 1, 128>}, {pipeline_mode = #tpu.pipeline_mode<synchronous>, transform_indices = @transform_11, window_bounds = array<i64: 128, 128>}, {pipeline_mode = #tpu.pipeline_mode<synchronous>, transform_indices = @transform_12, window_bounds = array<i64: 1, 128>}, {transform_indices = @transform_13, window_bounds = array<i64: 128, 128>}]} {
    %c0 = arith.constant 0 : index
    %c0_0 = arith.constant 0 : index
    %0 = vector.load %arg1[%c0, %c0_0] : memref<128x10xbf16, #tpu.memory_space<vmem>>, vector<128x10xbf16>
    %c0_1 = arith.constant 0 : index
    %c0_2 = arith.constant 0 : index
    %1 = vector.load %arg2[%c0_1, %c0_2] : memref<10x128xbf16, #tpu.memory_space<vmem>>, vector<10x128xbf16>
    %cst = arith.constant dense<0.000000e+00> : vector<128x128xf32>
    %2 = tpu.matmul %0, %1, %cst {dimension_numbers = #tpu.dot_dimension_numbers<[1], [0], [0], [1], [0, 0, 1, 1], [], []>} : vector<128x10xbf16>, vector<10x128xbf16>, vector<128x128xf32> -> vector<128x128xf32>
    %c0_3 = arith.constant 0 : index
    %c0_4 = arith.constant 0 : index
    %3 = vector.load %arg3[%c0_3, %c0_4] : memref<1x128xf32, #tpu.memory_space<vmem>>, vector<1x128xf32>
    %4 = vector.broadcast %3 : vector<1x128xf32> to vector<128x128xf32>
    %5 = arith.addf %2, %4 : vector<128x128xf32>
    %cst_5 = arith.constant 0.000000e+00 : f32
    %6 = vector.broadcast %cst_5 : f32 to vector<128x128xf32>
    %7 = arith.maximumf %5, %6 : vector<128x128xf32>
    %8 = arith.truncf %7 : vector<128x128xf32> to vector<128x128xbf16>
    %c0_6 = arith.constant 0 : index
    %c0_7 = arith.constant 0 : index
    %9 = vector.load %arg4[%c0_6, %c0_7] : memref<128x128xbf16, #tpu.memory_space<vmem>>, vector<128x128xbf16>
    %cst_8 = arith.constant dense<0.000000e+00> : vector<128x128xf32>
    %10 = tpu.matmul %8, %9, %cst_8 {dimension_numbers = #tpu.dot_dimension_numbers<[1], [0], [0], [1], [0, 0, 1, 1], [], []>} : vector<128x128xbf16>, vector<128x128xbf16>, vector<128x128xf32> -> vector<128x128xf32>
    %c0_9 = arith.constant 0 : index
    %c0_10 = arith.constant 0 : index
    %11 = vector.load %arg5[%c0_9, %c0_10] : memref<1x128xf32, #tpu.memory_space<vmem>>, vector<1x128xf32>
    %12 = vector.broadcast %11 : vector<1x128xf32> to vector<128x128xf32>
    %13 = arith.addf %10, %12 : vector<128x128xf32>
    %cst_11 = arith.constant 0.000000e+00 : f32
    %14 = vector.broadcast %cst_11 : f32 to vector<128x128xf32>
    %15 = arith.maximumf %13, %14 : vector<128x128xf32>
    %16 = arith.truncf %15 : vector<128x128xf32> to vector<128x128xbf16>
    %c0_12 = arith.constant 0 : index
    %c0_13 = arith.constant 0 : index
    %17 = vector.load %arg6[%c0_12, %c0_13] : memref<128x128xbf16, #tpu.memory_space<vmem>>, vector<128x128xbf16>
    %cst_14 = arith.constant dense<0.000000e+00> : vector<128x128xf32>
    %18 = tpu.matmul %16, %17, %cst_14 {dimension_numbers = #tpu.dot_dimension_numbers<[1], [0], [0], [1], [0, 0, 1, 1], [], []>} : vector<128x128xbf16>, vector<128x128xbf16>, vector<128x128xf32> -> vector<128x128xf32>
    %c0_15 = arith.constant 0 : index
    %c0_16 = arith.constant 0 : index
    %19 = vector.load %arg7[%c0_15, %c0_16] : memref<1x128xf32, #tpu.memory_space<vmem>>, vector<1x128xf32>
    %20 = vector.broadcast %19 : vector<1x128xf32> to vector<128x128xf32>
    %21 = arith.addf %18, %20 : vector<128x128xf32>
    %cst_17 = arith.constant 0.000000e+00 : f32
    %22 = vector.broadcast %cst_17 : f32 to vector<128x128xf32>
    %23 = arith.maximumf %21, %22 : vector<128x128xf32>
    %24 = arith.truncf %23 : vector<128x128xf32> to vector<128x128xbf16>
    %c0_18 = arith.constant 0 : index
    %c0_19 = arith.constant 0 : index
    %25 = vector.load %arg8[%c0_18, %c0_19] : memref<128x128xbf16, #tpu.memory_space<vmem>>, vector<128x128xbf16>
    %cst_20 = arith.constant dense<0.000000e+00> : vector<128x128xf32>
    %26 = tpu.matmul %24, %25, %cst_20 {dimension_numbers = #tpu.dot_dimension_numbers<[1], [0], [0], [1], [0, 0, 1, 1], [], []>} : vector<128x128xbf16>, vector<128x128xbf16>, vector<128x128xf32> -> vector<128x128xf32>
    %c0_21 = arith.constant 0 : index
    %c0_22 = arith.constant 0 : index
    %27 = vector.load %arg9[%c0_21, %c0_22] : memref<1x128xf32, #tpu.memory_space<vmem>>, vector<1x128xf32>
    %28 = vector.broadcast %27 : vector<1x128xf32> to vector<128x128xf32>
    %29 = arith.addf %26, %28 : vector<128x128xf32>
    %cst_23 = arith.constant 0.000000e+00 : f32
    %30 = vector.broadcast %cst_23 : f32 to vector<128x128xf32>
    %31 = arith.maximumf %29, %30 : vector<128x128xf32>
    %32 = arith.truncf %31 : vector<128x128xf32> to vector<128x128xbf16>
    %c0_24 = arith.constant 0 : index
    %c0_25 = arith.constant 0 : index
    %33 = vector.load %arg10[%c0_24, %c0_25] : memref<128x128xbf16, #tpu.memory_space<vmem>>, vector<128x128xbf16>
    %cst_26 = arith.constant dense<0.000000e+00> : vector<128x128xf32>
    %34 = tpu.matmul %32, %33, %cst_26 {dimension_numbers = #tpu.dot_dimension_numbers<[1], [0], [0], [1], [0, 0, 1, 1], [], []>} : vector<128x128xbf16>, vector<128x128xbf16>, vector<128x128xf32> -> vector<128x128xf32>
    %c0_27 = arith.constant 0 : index
    %c0_28 = arith.constant 0 : index
    %35 = vector.load %arg11[%c0_27, %c0_28] : memref<1x128xf32, #tpu.memory_space<vmem>>, vector<1x128xf32>
    %36 = vector.broadcast %35 : vector<1x128xf32> to vector<128x128xf32>
    %37 = arith.addf %34, %36 : vector<128x128xf32>
    %cst_29 = arith.constant 0.000000e+00 : f32
    %38 = vector.broadcast %cst_29 : f32 to vector<128x128xf32>
    %39 = arith.maximumf %37, %38 : vector<128x128xf32>
    %40 = arith.truncf %39 : vector<128x128xf32> to vector<128x128xbf16>
    %c0_30 = arith.constant 0 : index
    %c0_31 = arith.constant 0 : index
    %41 = vector.load %arg12[%c0_30, %c0_31] : memref<128x128xbf16, #tpu.memory_space<vmem>>, vector<128x128xbf16>
    %cst_32 = arith.constant dense<0.000000e+00> : vector<128x128xf32>
    %42 = tpu.matmul %40, %41, %cst_32 {dimension_numbers = #tpu.dot_dimension_numbers<[1], [0], [0], [1], [0, 0, 1, 1], [], []>} : vector<128x128xbf16>, vector<128x128xbf16>, vector<128x128xf32> -> vector<128x128xf32>
    %c0_33 = arith.constant 0 : index
    %c0_34 = arith.constant 0 : index
    %43 = vector.load %arg13[%c0_33, %c0_34] : memref<1x128xf32, #tpu.memory_space<vmem>>, vector<1x128xf32>
    %44 = vector.broadcast %43 : vector<1x128xf32> to vector<128x128xf32>
    %45 = arith.addf %42, %44 : vector<128x128xf32>
    %c0_35 = arith.constant 0 : index
    %c0_36 = arith.constant 0 : index
    %46 = vector.load %arg14[%c0_35, %c0_36] : memref<128x128xf32, #tpu.memory_space<vmem>>, vector<128x128xf32>
    tpu.vector_store %arg14[%c0_35, %c0_36], %45 {strides = array<i32>} : memref<128x128xf32, #tpu.memory_space<vmem>>, vector<128x128xf32>,
    return
  }
  func.func @transform_0(%arg0: i32) -> (i32, i32) {
    %c0_i32 = arith.constant 0 : i32
    %c0_i32_0 = arith.constant 0 : i32
    return %arg0, %c0_i32 : i32, i32
  }
  func.func @transform_1(%arg0: i32) -> (i32, i32) {
    %c0_i32 = arith.constant 0 : i32
    %c0_i32_0 = arith.constant 0 : i32
    %c0_i32_1 = arith.constant 0 : i32
    return %c0_i32, %c0_i32_0 : i32, i32
  }
  func.func @transform_2(%arg0: i32) -> (i32, i32) {
    %c0_i32 = arith.constant 0 : i32
    %c0_i32_0 = arith.constant 0 : i32
    %c0_i32_1 = arith.constant 0 : i32
    return %c0_i32, %c0_i32_0 : i32, i32
  }
  func.func @transform_3(%arg0: i32) -> (i32, i32) {
    %c0_i32 = arith.constant 0 : i32
    %c0_i32_0 = arith.constant 0 : i32
    %c0_i32_1 = arith.constant 0 : i32
    return %c0_i32, %c0_i32_0 : i32, i32
  }
  func.func @transform_4(%arg0: i32) -> (i32, i32) {
    %c0_i32 = arith.constant 0 : i32
    %c0_i32_0 = arith.constant 0 : i32
    %c0_i32_1 = arith.constant 0 : i32
    return %c0_i32, %c0_i32_0 : i32, i32
  }
  func.func @transform_5(%arg0: i32) -> (i32, i32) {
    %c0_i32 = arith.constant 0 : i32
    %c0_i32_0 = arith.constant 0 : i32
    %c0_i32_1 = arith.constant 0 : i32
    return %c0_i32, %c0_i32_0 : i32, i32
  }
  func.func @transform_6(%arg0: i32) -> (i32, i32) {
    %c0_i32 = arith.constant 0 : i32
    %c0_i32_0 = arith.constant 0 : i32
    %c0_i32_1 = arith.constant 0 : i32
    return %c0_i32, %c0_i32_0 : i32, i32
  }
  func.func @transform_7(%arg0: i32) -> (i32, i32) {
    %c0_i32 = arith.constant 0 : i32
    %c0_i32_0 = arith.constant 0 : i32
    %c0_i32_1 = arith.constant 0 : i32
    return %c0_i32, %c0_i32_0 : i32, i32
  }
  func.func @transform_8(%arg0: i32) -> (i32, i32) {
    %c0_i32 = arith.constant 0 : i32
    %c0_i32_0 = arith.constant 0 : i32
    %c0_i32_1 = arith.constant 0 : i32
    return %c0_i32, %c0_i32_0 : i32, i32
  }
  func.func @transform_9(%arg0: i32) -> (i32, i32) {
    %c0_i32 = arith.constant 0 : i32
    %c0_i32_0 = arith.constant 0 : i32
    %c0_i32_1 = arith.constant 0 : i32
    return %c0_i32, %c0_i32_0 : i32, i32
  }
  func.func @transform_10(%arg0: i32) -> (i32, i32) {
    %c0_i32 = arith.constant 0 : i32
    %c0_i32_0 = arith.constant 0 : i32
    %c0_i32_1 = arith.constant 0 : i32
    return %c0_i32, %c0_i32_0 : i32, i32
  }
  func.func @transform_11(%arg0: i32) -> (i32, i32) {
    %c0_i32 = arith.constant 0 : i32
    %c0_i32_0 = arith.constant 0 : i32
    %c0_i32_1 = arith.constant 0 : i32
    return %c0_i32, %c0_i32_0 : i32, i32
  }
  func.func @transform_12(%arg0: i32) -> (i32, i32) {
    %c0_i32 = arith.constant 0 : i32
    %c0_i32_0 = arith.constant 0 : i32
    %c0_i32_1 = arith.constant 0 : i32
    return %c0_i32, %c0_i32_0 : i32, i32
  }
  func.func @transform_13(%arg0: i32) -> (i32, i32) {
    %c0_i32 = arith.constant 0 : i32
    %c0_i32_0 = arith.constant 0 : i32
    return %arg0, %c0_i32 : i32, i32
  }
}

</mosaic_0001>

<llo_original>
// kernel: generic_block_forward.1
$region0: #{generic_block_forward.1}
  #allocation0 [shape = 'u32[]', space=smem, size = 0x4, offset = 0x4, fixed_abs, tag = 'smem constant byte address 0x4 - core index']
  #allocation1 [shape = 'u32[144,128]{1,0:T(1,128)}', space=vmem, size = 0x12000, scoped, tag = 'internal scratch']
  %s0 = inlined_call_operand.vmem [shape: bf16[256,10], index: 0, kind: input, shape index: {}]
  %s1 = inlined_call_operand.vmem [shape: bf16[10,128], index: 1, kind: input, shape index: {}]
  %s2 = inlined_call_operand.vmem [shape: f32[1,128], index: 2, kind: input, shape index: {}]
  %s3 = inlined_call_operand.vmem [shape: bf16[128,128], index: 3, kind: input, shape index: {}]
  %s4 = inlined_call_operand.vmem [shape: f32[1,128], index: 4, kind: input, shape index: {}]
  %s5 = inlined_call_operand.vmem [shape: bf16[128,128], index: 5, kind: input, shape index: {}]
  %s6 = inlined_call_operand.vmem [shape: f32[1,128], index: 6, kind: input, shape index: {}]
  %s7 = inlined_call_operand.vmem [shape: bf16[128,128], index: 7, kind: input, shape index: {}]
  %s8 = inlined_call_operand.vmem [shape: f32[1,128], index: 8, kind: input, shape index: {}]
  %s9 = inlined_call_operand.hbm [shape: bf16[128,128], index: 9, kind: input, shape index: {}]
  %s10 = inlined_call_operand.vmem [shape: f32[1,128], index: 10, kind: input, shape index: {}]
  %s11 = inlined_call_operand.hbm [shape: bf16[128,128], index: 11, kind: input, shape index: {}]
  %s12 = inlined_call_operand.hbm [shape: f32[1,128], index: 12, kind: input, shape index: {}]
  %s13 = inlined_call_operand.vmem [shape: f32[256,128], index: 13, kind: output, shape index: {}]
  %s14 = sld [smem:[#allocation0]]
  $region97: #{generic_block_forward.1} parent=0
    _
  %s16 = ssub.s32 1, %s14
  %s17 = scalar_select 0, %s16, %s14
  $region1: #{generic_block_forward.1} parent=0
    #allocation2 [shape = 'u8[32768]{0}', space=vmem, size = 0x8000, scoped, tag = 'input window, operand 9, single buffered']
    #allocation3 [shape = 's32[2]{0}', space=sflag, size = 0x8, scoped, tag = 'scoped memory for generic_block_forward.1']
    #allocation4 [shape = 'u8[32768]{0}', space=vmem, size = 0x8000, scoped, tag = 'input window, operand 11, single buffered']
    #allocation5 [shape = 's32[1]{0}', space=sflag, size = 0x4, scoped, tag = 'scoped memory for generic_block_forward.1']
    #allocation6 [shape = 'u8[512]{0}', space=vmem, size = 0x400, scoped, tag = 'input window, operand 12, single buffered']
    %18 = vsyncpa [#allocation3], 0
    %19 = vsyncpa [#allocation5], 0
    loop: start=0, step=1, limit=4
    $region2: #{generic_block_forward.1} parent=1 // loop_pre_header
      _
    $region3: #{generic_block_forward.1} parent=1 // loop_header
      %s21 = sphi 0, %s25
      %p22 = scmp.ge.s32.totalorder %s21, 4
      %s31 = sphi 0, %s33
      %s34 = sphi 0, %s31
      %s35 = sphi 0, %s34
      %s51 = sphi 0, %s35
      %s55 = sphi 0, %s55
      %s57 = sphi 0, %s55
      %s58 = sphi 0, %s57
      %s72 = sphi 0, %s58
      %s76 = sphi 0, %s76
      %s78 = sphi 0, %s76
      %s79 = sphi 0, %s78
      %s93 = sphi 0, %s79
      %s97 = sphi 0, %s97
      %s99 = sphi 0, %s97
      %s100 = sphi 0, %s99
      %s114 = sphi 0, %s100
      %s118 = sphi 0, %s118
      %s120 = sphi 0, %s118
      %s121 = sphi 0, %s120
      %s135 = sphi 0, %s121
      %s139 = sphi 0, %s139
      %s141 = sphi 0, %s139
      %s142 = sphi 0, %s141
      %s156 = sphi 0, %s142
      %s160 = sphi 0, %s160
      %s162 = sphi 0, %s160
      %s163 = sphi 0, %s162
      %s177 = sphi 0, %s163
      %s181 = sphi 0, %s181
      %s183 = sphi 0, %s181
      %s184 = sphi 0, %s183
      %s198 = sphi 0, %s184
      %s202 = sphi 0, %s202
      %s204 = sphi 0, %s202
      %s205 = sphi 0, %s204
      %s219 = sphi 0, %s205
      %s223 = sphi 0, %s223
      %s225 = sphi 0, %s223
      %s226 = sphi 0, %s225
      %s240 = sphi 0, %s226
      %s244 = sphi 0, %s244
      %s246 = sphi 0, %s244
      %s247 = sphi 0, %s246
      %s261 = sphi 0, %s247
      %s265 = sphi 0, %s265
      %s267 = sphi 0, %s265
      %s268 = sphi 0, %s267
      %s282 = sphi 0, %s268
      %s286 = sphi 0, %s286
      %s288 = sphi 0, %s286
      %s289 = sphi 0, %s288
      %s303 = sphi 0, %s289
      %s309 = sphi 0, %s311
      %s312 = sphi 0, %s309
      %s313 = sphi 0, %s312
      %s329 = sphi 0, %s313
    $region4: #{generic_block_forward.1} parent=1 // loop_header_branch
      %24 = sbr.rel (%p22) target = $region8
    $region5: #{generic_block_forward.1} parent=1 // loop_body
      %s26 = ssub.s32 %s21, 1
      %s27 = ssub.s32 %s21, 2
      %s28 = sadd.s32 %s21, 1
      %s29 = ssub.s32 %s21, %s28
      %p30 = scmp.eq.s32.totalorder %s29, 0
      %s32 = sadd.s32 %s31, 1
      %s33 = scalar_select %p30, %s31, %s32
      %p36 = pneg %p30
      %p37 = scmp.eq.s32.totalorder %s21, 1
      %p38 = por %p36, %p37
      %p39 = scmp.ne.s32.totalorder %s31, %s34
      %p40 = scmp.eq.s32.totalorder %s21, 0
      %p41 = por %p39, %p40
      %p42 = scmp.ne.s32.totalorder %s31, %s34
      %p43 = scmp.eq.s32.totalorder %s26, 1
      %p44 = por %p42, %p43
      %p45 = scmp.ne.s32.totalorder %s34, %s35
      %p46 = scmp.eq.s32.totalorder %s26, 0
      %p47 = por %p45, %p46
      %p48 = scmp.ne.s32.totalorder %s34, %s35
      %p49 = scmp.eq.s32.totalorder %s27, 1
      %p50 = por %p48, %p49
      %p52 = scmp.ne.s32.totalorder %s35, %s51
      %p53 = scmp.eq.s32.totalorder %s27, 0
      %p54 = por %p52, %p53
      %s56 = sadd.s32 %s55, 1
      %p59 = scmp.eq.s32.totalorder %s21, 1
      %p60 = scmp.ne.s32.totalorder %s55, %s57
      %p61 = scmp.eq.s32.totalorder %s21, 0
      %p62 = por %p60, %p61
      %p63 = scmp.ne.s32.totalorder %s55, %s57
      %p64 = scmp.eq.s32.totalorder %s26, 1
      %p65 = por %p63, %p64
      %p66 = scmp.ne.s32.totalorder %s57, %s58
      %p67 = scmp.eq.s32.totalorder %s26, 0
      %p68 = por %p66, %p67
      %p69 = scmp.ne.s32.totalorder %s57, %s58
      %p70 = scmp.eq.s32.totalorder %s27, 1
      %p71 = por %p69, %p70
      %p73 = scmp.ne.s32.totalorder %s58, %s72
      %p74 = scmp.eq.s32.totalorder %s27, 0
      %p75 = por %p73, %p74
      %s77 = sadd.s32 %s76, 1
      %p80 = scmp.eq.s32.totalorder %s21, 1
      %p81 = scmp.ne.s32.totalorder %s76, %s78
      %p82 = scmp.eq.s32.totalorder %s21, 0
      %p83 = por %p81, %p82
      %p84 = scmp.ne.s32.totalorder %s76, %s78
      %p85 = scmp.eq.s32.totalorder %s26, 1
      %p86 = por %p84, %p85
      %p87 = scmp.ne.s32.totalorder %s78, %s79
      %p88 = scmp.eq.s32.totalorder %s26, 0
      %p89 = por %p87, %p88
      %p90 = scmp.ne.s32.totalorder %s78, %s79
      %p91 = scmp.eq.s32.totalorder %s27, 1
      %p92 = por %p90, %p91
      %p94 = scmp.ne.s32.totalorder %s79, %s93
      %p95 = scmp.eq.s32.totalorder %s27, 0
      %p96 = por %p94, %p95
      %s98 = sadd.s32 %s97, 1
      %p101 = scmp.eq.s32.totalorder %s21, 1
      %p102 = scmp.ne.s32.totalorder %s97, %s99
      %p103 = scmp.eq.s32.totalorder %s21, 0
      %p104 = por %p102, %p103
      %p105 = scmp.ne.s32.totalorder %s97, %s99
      %p106 = scmp.eq.s32.totalorder %s26, 1
      %p107 = por %p105, %p106
      %p108 = scmp.ne.s32.totalorder %s99, %s100
      %p109 = scmp.eq.s32.totalorder %s26, 0
      %p110 = por %p108, %p109
      %p111 = scmp.ne.s32.totalorder %s99, %s100
      %p112 = scmp.eq.s32.totalorder %s27, 1
      %p113 = por %p111, %p112
      %p115 = scmp.ne.s32.totalorder %s100, %s114
      %p116 = scmp.eq.s32.totalorder %s27, 0
      %p117 = por %p115, %p116
      %s119 = sadd.s32 %s118, 1
      %p122 = scmp.eq.s32.totalorder %s21, 1
      %p123 = scmp.ne.s32.totalorder %s118, %s120
      %p124 = scmp.eq.s32.totalorder %s21, 0
      %p125 = por %p123, %p124
      %p126 = scmp.ne.s32.totalorder %s118, %s120
      %p127 = scmp.eq.s32.totalorder %s26, 1
      %p128 = por %p126, %p127
      %p129 = scmp.ne.s32.totalorder %s120, %s121
      %p130 = scmp.eq.s32.totalorder %s26, 0
      %p131 = por %p129, %p130
      %p132 = scmp.ne.s32.totalorder %s120, %s121
      %p133 = scmp.eq.s32.totalorder %s27, 1
      %p134 = por %p132, %p133
      %p136 = scmp.ne.s32.totalorder %s121, %s135
      %p137 = scmp.eq.s32.totalorder %s27, 0
      %p138 = por %p136, %p137
      %s140 = sadd.s32 %s139, 1
      %p143 = scmp.eq.s32.totalorder %s21, 1
      %p144 = scmp.ne.s32.totalorder %s139, %s141
      %p145 = scmp.eq.s32.totalorder %s21, 0
      %p146 = por %p144, %p145
      %p147 = scmp.ne.s32.totalorder %s139, %s141
      %p148 = scmp.eq.s32.totalorder %s26, 1
      %p149 = por %p147, %p148
      %p150 = scmp.ne.s32.totalorder %s141, %s142
      %p151 = scmp.eq.s32.totalorder %s26, 0
      %p152 = por %p150, %p151
      %p153 = scmp.ne.s32.totalorder %s141, %s142
      %p154 = scmp.eq.s32.totalorder %s27, 1
      %p155 = por %p153, %p154
      %p157 = scmp.ne.s32.totalorder %s142, %s156
      %p158 = scmp.eq.s32.totalorder %s27, 0
      %p159 = por %p157, %p158
      %s161 = sadd.s32 %s160, 1
      %p164 = scmp.eq.s32.totalorder %s21, 1
      %p165 = scmp.ne.s32.totalorder %s160, %s162
      %p166 = scmp.eq.s32.totalorder %s21, 0
      %p167 = por %p165, %p166
      %p168 = scmp.ne.s32.totalorder %s160, %s162
      %p169 = scmp.eq.s32.totalorder %s26, 1
      %p170 = por %p168, %p169
      %p171 = scmp.ne.s32.totalorder %s162, %s163
      %p172 = scmp.eq.s32.totalorder %s26, 0
      %p173 = por %p171, %p172
      %p174 = scmp.ne.s32.totalorder %s162, %s163
      %p175 = scmp.eq.s32.totalorder %s27, 1
      %p176 = por %p174, %p175
      %p178 = scmp.ne.s32.totalorder %s163, %s177
      %p179 = scmp.eq.s32.totalorder %s27, 0
      %p180 = por %p178, %p179
      %s182 = sadd.s32 %s181, 1
      %p185 = scmp.eq.s32.totalorder %s21, 1
      %p186 = scmp.ne.s32.totalorder %s181, %s183
      %p187 = scmp.eq.s32.totalorder %s21, 0
      %p188 = por %p186, %p187
      %p189 = scmp.ne.s32.totalorder %s181, %s183
      %p190 = scmp.eq.s32.totalorder %s26, 1
      %p191 = por %p189, %p190
      %p192 = scmp.ne.s32.totalorder %s183, %s184
      %p193 = scmp.eq.s32.totalorder %s26, 0
      %p194 = por %p192, %p193
      %p195 = scmp.ne.s32.totalorder %s183, %s184
      %p196 = scmp.eq.s32.totalorder %s27, 1
      %p197 = por %p195, %p196
      %p199 = scmp.ne.s32.totalorder %s184, %s198
      %p200 = scmp.eq.s32.totalorder %s27, 0
      %p201 = por %p199, %p200
      %s203 = sadd.s32 %s202, 1
      %p206 = scmp.eq.s32.totalorder %s21, 1
      %p207 = scmp.ne.s32.totalorder %s202, %s204
      %p208 = scmp.eq.s32.totalorder %s21, 0
      %p209 = por %p207, %p208
      %p210 = scmp.ne.s32.totalorder %s202, %s204
      %p211 = scmp.eq.s32.totalorder %s26, 1
      %p212 = por %p210, %p211
      %p213 = scmp.ne.s32.totalorder %s204, %s205
      %p214 = scmp.eq.s32.totalorder %s26, 0
      %p215 = por %p213, %p214
      %p216 = scmp.ne.s32.totalorder %s204, %s205
      %p217 = scmp.eq.s32.totalorder %s27, 1
      %p218 = por %p216, %p217
      %p220 = scmp.ne.s32.totalorder %s205, %s219
      %p221 = scmp.eq.s32.totalorder %s27, 0
      %p222 = por %p220, %p221
      %s224 = sadd.s32 %s223, 1
      %p227 = scmp.eq.s32.totalorder %s21, 1
      %p228 = scmp.ne.s32.totalorder %s223, %s225
      %p229 = scmp.eq.s32.totalorder %s21, 0
      %p230 = por %p228, %p229
      %p231 = scmp.ne.s32.totalorder %s223, %s225
      %p232 = scmp.eq.s32.totalorder %s26, 1
      %p233 = por %p231, %p232
      %p234 = scmp.ne.s32.totalorder %s225, %s226
      %p235 = scmp.eq.s32.totalorder %s26, 0
      %p236 = por %p234, %p235
      %p237 = scmp.ne.s32.totalorder %s225, %s226
      %p238 = scmp.eq.s32.totalorder %s27, 1
      %p239 = por %p237, %p238
      %p241 = scmp.ne.s32.totalorder %s226, %s240
      %p242 = scmp.eq.s32.totalorder %s27, 0
      %p243 = por %p241, %p242
      %s245 = sadd.s32 %s244, 1
      %p248 = scmp.eq.s32.totalorder %s21, 1
      %p249 = scmp.ne.s32.totalorder %s244, %s246
      %p250 = scmp.eq.s32.totalorder %s21, 0
      %p251 = por %p249, %p250
      %p252 = scmp.ne.s32.totalorder %s244, %s246
      %p253 = scmp.eq.s32.totalorder %s26, 1
      %p254 = por %p252, %p253
      %p255 = scmp.ne.s32.totalorder %s246, %s247
      %p256 = scmp.eq.s32.totalorder %s26, 0
      %p257 = por %p255, %p256
      %p258 = scmp.ne.s32.totalorder %s246, %s247
      %p259 = scmp.eq.s32.totalorder %s27, 1
      %p260 = por %p258, %p259
      %p262 = scmp.ne.s32.totalorder %s247, %s261
      %p263 = scmp.eq.s32.totalorder %s27, 0
      %p264 = por %p262, %p263
      %s266 = sadd.s32 %s265, 1
      %p269 = scmp.eq.s32.totalorder %s21, 1
      %p270 = scmp.ne.s32.totalorder %s265, %s267
      %p271 = scmp.eq.s32.totalorder %s21, 0
      %p272 = por %p270, %p271
      %p273 = scmp.ne.s32.totalorder %s265, %s267
      %p274 = scmp.eq.s32.totalorder %s26, 1
      %p275 = por %p273, %p274
      %p276 = scmp.ne.s32.totalorder %s267, %s268
      %p277 = scmp.eq.s32.totalorder %s26, 0
      %p278 = por %p276, %p277
      %p279 = scmp.ne.s32.totalorder %s267, %s268
      %p280 = scmp.eq.s32.totalorder %s27, 1
      %p281 = por %p279, %p280
      %p283 = scmp.ne.s32.totalorder %s268, %s282
      %p284 = scmp.eq.s32.totalorder %s27, 0
      %p285 = por %p283, %p284
      %s287 = sadd.s32 %s286, 1
      %p290 = scmp.eq.s32.totalorder %s21, 1
      %p291 = scmp.ne.s32.totalorder %s286, %s288
      %p292 = scmp.eq.s32.totalorder %s21, 0
      %p293 = por %p291, %p292
      %p294 = scmp.ne.s32.totalorder %s286, %s288
      %p295 = scmp.eq.s32.totalorder %s26, 1
      %p296 = por %p294, %p295
      %p297 = scmp.ne.s32.totalorder %s288, %s289
      %p298 = scmp.eq.s32.totalorder %s26, 0
      %p299 = por %p297, %p298
      %p300 = scmp.ne.s32.totalorder %s288, %s289
      %p301 = scmp.eq.s32.totalorder %s27, 1
      %p302 = por %p300, %p301
      %p304 = scmp.ne.s32.totalorder %s289, %s303
      %p305 = scmp.eq.s32.totalorder %s27, 0
      %p306 = por %p304, %p305
      %s307 = ssub.s32 %s21, %s28
      %p308 = scmp.eq.s32.totalorder %s307, 0
      %s310 = sadd.s32 %s309, 1
      %s311 = scalar_select %p308, %s309, %s310
      %p314 = pneg %p308
      %p315 = scmp.eq.s32.totalorder %s21, 1
      %p316 = por %p314, %p315
      %p317 = scmp.ne.s32.totalorder %s309, %s312
      %p318 = scmp.eq.s32.totalorder %s21, 0
      %p319 = por %p317, %p318
      %p320 = scmp.ne.s32.totalorder %s309, %s312
      %p321 = scmp.eq.s32.totalorder %s26, 1
      %p322 = por %p320, %p321
      %p323 = scmp.ne.s32.totalorder %s312, %s313
      %p324 = scmp.eq.s32.totalorder %s26, 0
      %p325 = por %p323, %p324
      %p326 = scmp.ne.s32.totalorder %s312, %s313
      %p327 = scmp.eq.s32.totalorder %s27, 1
      %p328 = por %p326, %p327
      %p330 = scmp.ne.s32.totalorder %s313, %s329
      %p331 = scmp.eq.s32.totalorder %s27, 0
      %p332 = por %p330, %p331
      %p333 = scmp.le.s32.totalorder 1, %s21
      %p334 = scmp.lt.s32.totalorder %s21, 3
      %p335 = pnand %p333, %p334
      %p336 = pneg %p335
      // Predicated region
      $region9: #{generic_block_forward.1} parent=5 // pred_check
        _
      $region10: #{generic_block_forward.1} parent=5 // pred_check_branch
        %338 = sbr.rel (%p335) target = $region12
      $region11: #{generic_block_forward.1} parent=5 // pred_region
        %s339 = ssub.s32 %s21, 1
        // Predicated region
        $region13: #{generic_block_forward.1} parent=11 // pred_check
          %p340 = pneg %p68
        $region14: #{generic_block_forward.1} parent=11 // pred_check_branch
          %342 = sbr.rel (%p340) target = $region16
        $region15: #{generic_block_forward.1} parent=11 // pred_region
          _
        $region16: #{generic_block_forward.1} parent=11 // pred_fallthru
          _
        // Predicated region
        $region17: #{generic_block_forward.1} parent=11 // pred_check
          %p343 = pneg %p89
        $region18: #{generic_block_forward.1} parent=11 // pred_check_branch
          %345 = sbr.rel (%p343) target = $region20
        $region19: #{generic_block_forward.1} parent=11 // pred_region
          _
        $region20: #{generic_block_forward.1} parent=11 // pred_fallthru
          _
        // Predicated region
        $region21: #{generic_block_forward.1} parent=11 // pred_check
          %p346 = pneg %p110
        $region22: #{generic_block_forward.1} parent=11 // pred_check_branch
          %348 = sbr.rel (%p346) target = $region24
        $region23: #{generic_block_forward.1} parent=11 // pred_region
          _
        $region24: #{generic_block_forward.1} parent=11 // pred_fallthru
          _
        // Predicated region
        $region25: #{generic_block_forward.1} parent=11 // pred_check
          %p349 = pneg %p131
        $region26: #{generic_block_forward.1} parent=11 // pred_check_branch
          %351 = sbr.rel (%p349) target = $region28
        $region27: #{generic_block_forward.1} parent=11 // pred_region
          _
        $region28: #{generic_block_forward.1} parent=11 // pred_fallthru
          _
        // Predicated region
        $region29: #{generic_block_forward.1} parent=11 // pred_check
          %p352 = pneg %p152
        $region30: #{generic_block_forward.1} parent=11 // pred_check_branch
          %354 = sbr.rel (%p352) target = $region32
        $region31: #{generic_block_forward.1} parent=11 // pred_region
          _
        $region32: #{generic_block_forward.1} parent=11 // pred_fallthru
          _
        // Predicated region
        $region33: #{generic_block_forward.1} parent=11 // pred_check
          %p355 = pneg %p173
        $region34: #{generic_block_forward.1} parent=11 // pred_check_branch
          %357 = sbr.rel (%p355) target = $region36
        $region35: #{generic_block_forward.1} parent=11 // pred_region
          _
        $region36: #{generic_block_forward.1} parent=11 // pred_fallthru
          _
        // Predicated region
        $region37: #{generic_block_forward.1} parent=11 // pred_check
          %p358 = pneg %p194
        $region38: #{generic_block_forward.1} parent=11 // pred_check_branch
          %360 = sbr.rel (%p358) target = $region40
        $region39: #{generic_block_forward.1} parent=11 // pred_region
          _
        $region40: #{generic_block_forward.1} parent=11 // pred_fallthru
          _
        // Predicated region
        $region41: #{generic_block_forward.1} parent=11 // pred_check
          %p361 = pneg %p215
        $region42: #{generic_block_forward.1} parent=11 // pred_check_branch
          %363 = sbr.rel (%p361) target = $region44
        $region43: #{generic_block_forward.1} parent=11 // pred_region
          _
        $region44: #{generic_block_forward.1} parent=11 // pred_fallthru
          _
        // Predicated region
        $region45: #{generic_block_forward.1} parent=11 // pred_check
          %p364 = pneg %p236
        $region46: #{generic_block_forward.1} parent=11 // pred_check_branch
          %366 = sbr.rel (%p364) target = $region48
        $region47: #{generic_block_forward.1} parent=11 // pred_region
          %s368 = ssub.s32 1024, 1024
          %369 = vsyncadd [#allocation3], %s368
          %s370 = sshll.u32 [#allocation2], 4
          %s371 = int_to_ptr.vmem [resolvable:$true] %s370
          %376 = dma.hbm_to_vmem [thread:$0]  %s9, 1024, %s371, [#allocation3], 64, 64, 4
        $region48: #{generic_block_forward.1} parent=11 // pred_fallthru
          _
        // Predicated region
        $region49: #{generic_block_forward.1} parent=11 // pred_check
          %p377 = pneg %p257
        $region50: #{generic_block_forward.1} parent=11 // pred_check_branch
          %379 = sbr.rel (%p377) target = $region52
        $region51: #{generic_block_forward.1} parent=11 // pred_region
          _
        $region52: #{generic_block_forward.1} parent=11 // pred_fallthru
          _
        // Predicated region
        $region53: #{generic_block_forward.1} parent=11 // pred_check
          %p380 = pneg %p278
        $region54: #{generic_block_forward.1} parent=11 // pred_check_branch
          %382 = sbr.rel (%p380) target = $region56
        $region55: #{generic_block_forward.1} parent=11 // pred_region
          %s384 = ssub.s32 1024, 1024
          %385 = vsyncadd [#allocation5], %s384
          %s386 = sshll.u32 [#allocation4], 4
          %s387 = int_to_ptr.vmem [resolvable:$true] %s386
          %392 = dma.hbm_to_vmem [thread:$0]  %s11, 1024, %s387, [#allocation5], 64, 64, 4
        $region56: #{generic_block_forward.1} parent=11 // pred_fallthru
          _
        // Predicated region
        $region57: #{generic_block_forward.1} parent=11 // pred_check
          %p393 = pneg %p299
        $region58: #{generic_block_forward.1} parent=11 // pred_check_branch
          %395 = sbr.rel (%p393) target = $region60
        $region59: #{generic_block_forward.1} parent=11 // pred_region
          %s397 = ssub.s32 16, 16
          %398 = vsyncadd [#allocation5], %s397
          %s400 = sshll.u32 [#allocation6], 4
          %s401 = int_to_ptr.vmem [resolvable:$true] %s400
          %403 = dma.hbm_to_vmem [thread:$0]  %s12, 16, %s401, [#allocation5]
        $region60: #{generic_block_forward.1} parent=11 // pred_fallthru
          _
      $region12: #{generic_block_forward.1} parent=5 // pred_fallthru
        _
      %p404 = scmp.lt.s32.totalorder %s21, 2
      // Predicated region
      $region61: #{generic_block_forward.1} parent=5 // pred_check
        %p405 = pneg %p404
      $region62: #{generic_block_forward.1} parent=5 // pred_check_branch
        %407 = sbr.rel (%p405) target = $region64
      $region63: #{generic_block_forward.1} parent=5 // pred_region
        // Predicated region
        $region65: #{generic_block_forward.1} parent=63 // pred_check
          %p408 = pneg %p41
        $region66: #{generic_block_forward.1} parent=63 // pred_check_branch
          %410 = sbr.rel (%p408) target = $region68
        $region67: #{generic_block_forward.1} parent=63 // pred_region
          %s411 = smul.u32 16, %s21
          %p412 = scmp.lt.s32.totalorder %s411, 31
          %s413 = scalar_select %p412, %s411, 31
          %s414 = smul.addr %s413, 4
          %s415 = scalar_lea.vmem %s0, %s414
          %s416 = smul.u32 16, %s21
        $region68: #{generic_block_forward.1} parent=63 // pred_fallthru
          _
      $region64: #{generic_block_forward.1} parent=5 // pred_fallthru
        _
      %p417 = scmp.le.s32.totalorder 1, %s21
      %p418 = scmp.lt.s32.totalorder %s21, 3
      %p419 = pnand %p417, %p418
      %p420 = pneg %p419
      // Predicated region
      $region69: #{generic_block_forward.1} parent=5 // pred_check
        _
      $region70: #{generic_block_forward.1} parent=5 // pred_check_branch
        %422 = sbr.rel (%p419) target = $region72
      $region71: #{generic_block_forward.1} parent=5 // pred_region
        %s423 = ssub.s32 %s21, 1
        // Predicated region
        $region73: #{generic_block_forward.1} parent=71 // pred_check
          %p424 = pneg %p236
        $region74: #{generic_block_forward.1} parent=71 // pred_check_branch
          %426 = sbr.rel (%p424) target = $region76
        $region75: #{generic_block_forward.1} parent=71 // pred_region
          %427 = dma.done [#allocation3], 1024
        $region76: #{generic_block_forward.1} parent=71 // pred_fallthru
          _
        // Predicated region
        $region77: #{generic_block_forward.1} parent=71 // pred_check
          %p428 = pneg %p278
        $region78: #{generic_block_forward.1} parent=71 // pred_check_branch
          %430 = sbr.rel (%p428) target = $region80
        $region79: #{generic_block_forward.1} parent=71 // pred_region
          %431 = dma.done [#allocation5], 1024
        $region80: #{generic_block_forward.1} parent=71 // pred_fallthru
          _
        // Predicated region
        $region81: #{generic_block_forward.1} parent=71 // pred_check
          %p432 = pneg %p299
        $region82: #{generic_block_forward.1} parent=71 // pred_check_branch
          %434 = sbr.rel (%p432) target = $region84
        $region83: #{generic_block_forward.1} parent=71 // pred_region
          %435 = dma.done [#allocation5], 16
        $region84: #{generic_block_forward.1} parent=71 // pred_fallthru
          _
        %s436 = smul.u32 16, %s26
        %p437 = scmp.lt.s32.totalorder %s436, 31
        %s438 = scalar_select %p437, %s436, 31
        %s439 = smul.addr %s438, 4
        %s440 = scalar_lea.vmem %s0, %s439
        %p441 = pneg %p47
        %p442 = pneg %p44
        %p443 = pneg %p68
        %p444 = pneg %p65
        %p445 = pneg %p89
        %p446 = pneg %p86
        %p447 = pneg %p110
        %p448 = pneg %p107
        %p449 = pneg %p131
        %p450 = pneg %p128
        %p451 = pneg %p152
        %p452 = pneg %p149
        %p453 = pneg %p173
        %p454 = pneg %p170
        %p455 = pneg %p194
        %p456 = pneg %p191
        %p457 = pneg %p215
        %p458 = pneg %p212
        %p459 = pneg %p236
        %p460 = pneg %p233
        %p461 = pneg %p257
        %p462 = pneg %p254
        %p463 = pneg %p278
        %p464 = pneg %p275
        %p465 = pneg %p299
        %p466 = pneg %p296
        %p467 = pneg %p325
        %p468 = pneg %p322
        %s469 = smul.u32 16, %s26
        %p470 = scmp.lt.s32.totalorder %s469, 31
        %s471 = scalar_select %p470, %s469, 31
        %s472 = smul.addr %s471, 8
        %s473 = scalar_lea.vmem %s13, %s472
        %s474 = smul.u32 16, %s26
        %p475 = scmp.lt.s32.totalorder %s474, 31
        %s476 = scalar_select %p475, %s474, 31
        %s477 = smul.addr %s476, 4
        %s478 = scalar_lea.vmem %s0, %s477
        %s479 = smul.u32 16, %s26
        %s480 = smul.u32 16, %s26
        %p481 = scmp.lt.s32.totalorder %s480, 31
        %s482 = scalar_select %p481, %s480, 31
        %s483 = smul.addr %s482, 8
        %s484 = scalar_lea.vmem %s13, %s483
        %s485 = smul.u32 16, %s26
        %v487 = vld [vmem:[%s478] sm:$0xf]
        %v488 = vld [vmem:[%s478 + $0x4] sm:$0xf]
        %v489 = vld [vmem:[%s478 + $0x8] sm:$0xf]
        %v490 = vld [vmem:[%s478 + $0xc] sm:$0xf]
        %v491 = vld [vmem:[%s478 + $0x10] sm:$0xf]
        %v492 = vld [vmem:[%s478 + $0x14] sm:$0xf]
        %v493 = vld [vmem:[%s478 + $0x18] sm:$0xf]
        %v494 = vld [vmem:[%s478 + $0x1c] sm:$0xf]
        %v495 = vld [vmem:[%s478 + $0x20] sm:$0xf]
        %v496 = vld [vmem:[%s478 + $0x24] sm:$0xf]
        %v497 = vld [vmem:[%s478 + $0x28] sm:$0xf]
        %v498 = vld [vmem:[%s478 + $0x2c] sm:$0xf]
        %v499 = vld [vmem:[%s478 + $0x30] sm:$0xf]
        %v500 = vld [vmem:[%s478 + $0x34] sm:$0xf]
        %v501 = vld [vmem:[%s478 + $0x38] sm:$0xf]
        %v502 = vld [vmem:[%s478 + $0x3c] sm:$0xf]
        %v503 = vld [vmem:[%s1] sm:$0xf]
        %v504 = vld [vmem:[%s1 + $0x4] sm:$0x1]
        %v505 = vld [vmem:[%s2] sm:$0x1]
        %v507 = vlaneseq
        %v508 = vshrl.u32 %v507, 7
        %v509 = vsub.s32 0, %v508
        %v510 = vrot.slane %v505, %v509
        %v528 = vunpack.c.l.b16 %v487
        %v529 = vunpack.c.l.b16 %v488
        %v530 = vunpack.c.l.b16 %v489
        %v531 = vunpack.c.l.b16 %v490
        %v532 = vunpack.c.l.b16 %v491
        %v533 = vunpack.c.l.b16 %v492
        %v534 = vunpack.c.l.b16 %v493
        %v535 = vunpack.c.l.b16 %v494
        %v536 = vunpack.c.l.b16 %v495
        %v537 = vunpack.c.l.b16 %v496
        %v538 = vunpack.c.l.b16 %v497
        %v539 = vunpack.c.l.b16 %v498
        %v540 = vunpack.c.l.b16 %v499
        %v541 = vunpack.c.l.b16 %v500
        %v542 = vunpack.c.l.b16 %v501
        %v543 = vunpack.c.l.b16 %v502
        %v544 = vpack.c.b16 %v529, %v528
        %v545 = vpack.c.b16 %v531, %v530
        %v546 = vpack.c.b16 %v533, %v532
        %v547 = vpack.c.b16 %v535, %v534
        %v548 = vpack.c.b16 %v537, %v536
        %v549 = vpack.c.b16 %v539, %v538
        %v550 = vpack.c.b16 %v541, %v540
        %v551 = vpack.c.b16 %v543, %v542
        %v554 = vunpack.c.l.b16 %v503
        %v555 = vunpack.c.l.b16 %v504
        %v556 = vpack.c.b16 %v555, %v554
        %vm557 = vcmask 80896
        %v559 = vsel %vm557, %v544, 0
        %v562 = vsel %vm557, %v545, 0
        %v565 = vsel %vm557, %v546, 0
        %v568 = vsel %vm557, %v547, 0
        %v571 = vsel %vm557, %v548, 0
        %v574 = vsel %vm557, %v549, 0
        %v577 = vsel %vm557, %v550, 0
        %v580 = vsel %vm557, %v551, 0
        %vm582 = vcmask 1044480
        %v584 = vsel %vm582, %v556, 0
        %586 = vmatprep.subr.bf16.mxu0 0
        %587 = vmatpush1.bf16.msra.mxu0 %v584
        %588 = vmatprep.subr.bf16.mxu0 0
        %589 = vmatpush1.bf16.msra.mxu0 0
        %590 = vmatprep.subr.bf16.mxu0 0
        %591 = vmatpush1.bf16.msra.mxu0 0
        %592 = vmatprep.subr.bf16.mxu0 0
        %593 = vmatpush1.bf16.msra.mxu0 0
        %594 = vmatprep.subr.bf16.mxu0 0
        %595 = vmatpush1.bf16.msra.mxu0 0
        %596 = vmatprep.subr.bf16.mxu0 0
        %597 = vmatpush1.bf16.msra.mxu0 0
        %598 = vmatprep.subr.bf16.mxu0 0
        %599 = vmatpush1.bf16.msra.mxu0 0
        %600 = vmatprep.subr.bf16.mxu0 0
        %601 = vmatpush1.bf16.msra.mxu0 0
        %602 = vmatprep.subr.bf16.mxu0 0
        %603 = vmatpush1.bf16.msra.mxu0 0
        %604 = vmatprep.subr.bf16.mxu0 0
        %605 = vmatpush1.bf16.msra.mxu0 0
        %606 = vmatprep.subr.bf16.mxu0 0
        %607 = vmatpush1.bf16.msra.mxu0 0
        %608 = vmatprep.subr.bf16.mxu0 0
        %609 = vmatpush1.bf16.msra.mxu0 0
        %610 = vmatprep.subr.bf16.mxu0 0
        %611 = vmatpush1.bf16.msra.mxu0 0
        %612 = vmatprep.subr.bf16.mxu0 0
        %613 = vmatpush1.bf16.msra.mxu0 0
        %614 = vmatprep.subr.bf16.mxu0 0
        %615 = vmatpush1.bf16.msra.mxu0 0
        %616 = vmatprep.subr.bf16.mxu0 0
        %617 = vmatpush1.bf16.msra.mxu0 0
        %618 = vmatprep.mubr.bf16.mxu0 0
        %619 = vmatmul.mubr.bf16.gmra.mrb[0].mxu0 %v559
        %v620 = vpop.f32.mrb[0].mxu0
        %v621 = vadd.f32 %v510, %v620
        %v622 = vpop.f32.mrb[0].mxu0
        %v623 = vpop.f32.mrb[0].mxu0
        %v624 = vadd.f32 %v510, %v623
        %v625 = vpop.f32.mrb[0].mxu0
        %626 = vmatprep.mubr.bf16.mxu0 0
        %627 = vmatmul.mubr.bf16.gmra.mrb[0].mxu0 %v562
        %v628 = vpop.f32.mrb[0].mxu0
        %v629 = vadd.f32 %v510, %v628
        %v630 = vpop.f32.mrb[0].mxu0
        %v631 = vpop.f32.mrb[0].mxu0
        %v632 = vadd.f32 %v510, %v631
        %v633 = vpop.f32.mrb[0].mxu0
        %634 = vmatprep.mubr.bf16.mxu0 0
        %635 = vmatmul.mubr.bf16.gmra.mrb[0].mxu0 %v565
        %v636 = vpop.f32.mrb[0].mxu0
        %v637 = vadd.f32 %v510, %v636
        %v638 = vpop.f32.mrb[0].mxu0
        %v639 = vpop.f32.mrb[0].mxu0
        %v640 = vadd.f32 %v510, %v639
        %v641 = vpop.f32.mrb[0].mxu0
        %642 = vmatprep.mubr.bf16.mxu0 0
        %643 = vmatmul.mubr.bf16.gmra.mrb[0].mxu0 %v568
        %v644 = vpop.f32.mrb[0].mxu0
        %v645 = vadd.f32 %v510, %v644
        %v646 = vpop.f32.mrb[0].mxu0
        %v647 = vpop.f32.mrb[0].mxu0
        %v648 = vadd.f32 %v510, %v647
        %v649 = vpop.f32.mrb[0].mxu0
        %650 = vmatprep.mubr.bf16.mxu0 0
        %651 = vmatmul.mubr.bf16.gmra.mrb[0].mxu0 %v571
        %v652 = vpop.f32.mrb[0].mxu0
        %v653 = vadd.f32 %v510, %v652
        %v654 = vpop.f32.mrb[0].mxu0
        %v655 = vpop.f32.mrb[0].mxu0
        %v656 = vadd.f32 %v510, %v655
        %v657 = vpop.f32.mrb[0].mxu0
        %658 = vmatprep.mubr.bf16.mxu0 0
        %659 = vmatmul.mubr.bf16.gmra.mrb[0].mxu0 %v574
        %v660 = vpop.f32.mrb[0].mxu0
        %v661 = vadd.f32 %v510, %v660
        %v662 = vpop.f32.mrb[0].mxu0
        %v663 = vpop.f32.mrb[0].mxu0
        %v664 = vadd.f32 %v510, %v663
        %v665 = vpop.f32.mrb[0].mxu0
        %666 = vmatprep.mubr.bf16.mxu0 0
        %667 = vmatmul.mubr.bf16.gmra.mrb[0].mxu0 %v577
        %v668 = vpop.f32.mrb[0].mxu0
        %v669 = vadd.f32 %v510, %v668
        %v670 = vpop.f32.mrb[0].mxu0
        %v671 = vpop.f32.mrb[0].mxu0
        %v672 = vadd.f32 %v510, %v671
        %v673 = vpop.f32.mrb[0].mxu0
        %674 = vmatprep.mubr.bf16.mxu0 0
        %675 = vmatmul.mubr.bf16.gmra.mrb[0].mxu0 %v580
        %v676 = vpop.f32.mrb[0].mxu0
        %v677 = vadd.f32 %v510, %v676
        %v678 = vpop.f32.mrb[0].mxu0
        %v679 = vpop.f32.mrb[0].mxu0
        %v680 = vadd.f32 %v510, %v679
        %v681 = vpop.f32.mrb[0].mxu0
        %682 = vdwg.mxu0
        %v683 = vmax.f32 %v621, 0.0
        %v684 = vmax.f32 %v624, 0.0
        %v685 = vmax.f32 %v629, 0.0
        %v686 = vmax.f32 %v632, 0.0
        %v687 = vmax.f32 %v637, 0.0
        %v688 = vmax.f32 %v640, 0.0
        %v689 = vmax.f32 %v645, 0.0
        %v690 = vmax.f32 %v648, 0.0
        %v691 = vmax.f32 %v653, 0.0
        %v692 = vmax.f32 %v656, 0.0
        %v693 = vmax.f32 %v661, 0.0
        %v694 = vmax.f32 %v664, 0.0
        %v695 = vmax.f32 %v669, 0.0
        %v696 = vmax.f32 %v672, 0.0
        %v697 = vmax.f32 %v677, 0.0
        %v698 = vmax.f32 %v680, 0.0
        %v699 = vpack.c.bf16 %v684, %v683
        %v700 = vpack.c.bf16 %v686, %v685
        %v701 = vpack.c.bf16 %v688, %v687
        %v702 = vpack.c.bf16 %v690, %v689
        %v703 = vpack.c.bf16 %v692, %v691
        %v704 = vpack.c.bf16 %v694, %v693
        %v705 = vpack.c.bf16 %v696, %v695
        %v706 = vpack.c.bf16 %v698, %v697
        %v707 = vld [vmem:[%s3] sm:$0xf]
        %v708 = vld [vmem:[%s3 + $0x4] sm:$0xf]
        %v709 = vld [vmem:[%s3 + $0x8] sm:$0xf]
        %v710 = vld [vmem:[%s3 + $0xc] sm:$0xf]
        %v711 = vld [vmem:[%s3 + $0x10] sm:$0xf]
        %v712 = vld [vmem:[%s3 + $0x14] sm:$0xf]
        %v713 = vld [vmem:[%s3 + $0x18] sm:$0xf]
        %v714 = vld [vmem:[%s3 + $0x1c] sm:$0xf]
        %v715 = vld [vmem:[%s3 + $0x20] sm:$0xf]
        %v716 = vld [vmem:[%s3 + $0x24] sm:$0xf]
        %v717 = vld [vmem:[%s3 + $0x28] sm:$0xf]
        %v718 = vld [vmem:[%s3 + $0x2c] sm:$0xf]
        %v719 = vld [vmem:[%s3 + $0x30] sm:$0xf]
        %v720 = vld [vmem:[%s3 + $0x34] sm:$0xf]
        %v721 = vld [vmem:[%s3 + $0x38] sm:$0xf]
        %v722 = vld [vmem:[%s3 + $0x3c] sm:$0xf]
        %v723 = vld [vmem:[%s4] sm:$0x1]
        %v725 = vlaneseq
        %v726 = vshrl.u32 %v725, 7
        %v727 = vsub.s32 0, %v726
        %v728 = vrot.slane %v723, %v727
        %v746 = vunpack.c.l.b16 %v707
        %v747 = vunpack.c.l.b16 %v708
        %v748 = vunpack.c.l.b16 %v709
        %v749 = vunpack.c.l.b16 %v710
        %v750 = vunpack.c.l.b16 %v711
        %v751 = vunpack.c.l.b16 %v712
        %v752 = vunpack.c.l.b16 %v713
        %v753 = vunpack.c.l.b16 %v714
        %v754 = vunpack.c.l.b16 %v715
        %v755 = vunpack.c.l.b16 %v716
        %v756 = vunpack.c.l.b16 %v717
        %v757 = vunpack.c.l.b16 %v718
        %v758 = vunpack.c.l.b16 %v719
        %v759 = vunpack.c.l.b16 %v720
        %v760 = vunpack.c.l.b16 %v721
        %v761 = vunpack.c.l.b16 %v722
        %v762 = vpack.c.b16 %v747, %v746
        %v763 = vpack.c.b16 %v749, %v748
        %v764 = vpack.c.b16 %v751, %v750
        %v765 = vpack.c.b16 %v753, %v752
        %v766 = vpack.c.b16 %v755, %v754
        %v767 = vpack.c.b16 %v757, %v756
        %v768 = vpack.c.b16 %v759, %v758
        %v769 = vpack.c.b16 %v761, %v760
        %778 = vmatprep.subr.bf16.mxu0 0
        %779 = vmatpush1.bf16.msra.mxu0 %v762
        %780 = vmatprep.subr.bf16.mxu0 0
        %781 = vmatpush1.bf16.msra.mxu0 %v763
        %782 = vmatprep.subr.bf16.mxu0 0
        %783 = vmatpush1.bf16.msra.mxu0 %v764
        %784 = vmatprep.subr.bf16.mxu0 0
        %785 = vmatpush1.bf16.msra.mxu0 %v765
        %786 = vmatprep.subr.bf16.mxu0 0
        %787 = vmatpush1.bf16.msra.mxu0 %v766
        %788 = vmatprep.subr.bf16.mxu0 0
        %789 = vmatpush1.bf16.msra.mxu0 %v767
        %790 = vmatprep.subr.bf16.mxu0 0
        %791 = vmatpush1.bf16.msra.mxu0 %v768
        %792 = vmatprep.subr.bf16.mxu0 0
        %793 = vmatpush1.bf16.msra.mxu0 %v769
        %794 = vmatprep.subr.bf16.mxu0 0
        %795 = vmatpush1.bf16.msra.mxu0 0
        %796 = vmatprep.subr.bf16.mxu0 0
        %797 = vmatpush1.bf16.msra.mxu0 0
        %798 = vmatprep.subr.bf16.mxu0 0
        %799 = vmatpush1.bf16.msra.mxu0 0
        %800 = vmatprep.subr.bf16.mxu0 0
        %801 = vmatpush1.bf16.msra.mxu0 0
        %802 = vmatprep.subr.bf16.mxu0 0
        %803 = vmatpush1.bf16.msra.mxu0 0
        %804 = vmatprep.subr.bf16.mxu0 0
        %805 = vmatpush1.bf16.msra.mxu0 0
        %806 = vmatprep.subr.bf16.mxu0 0
        %807 = vmatpush1.bf16.msra.mxu0 0
        %808 = vmatprep.subr.bf16.mxu0 0
        %809 = vmatpush1.bf16.msra.mxu0 0
        %810 = vmatprep.mubr.bf16.mxu0 0
        %811 = vmatmul.mubr.bf16.gmra.mrb[0].mxu0 %v699
        %v812 = vpop.f32.mrb[0].mxu0
        %v813 = vadd.f32 %v728, %v812
        %v814 = vpop.f32.mrb[0].mxu0
        %v815 = vpop.f32.mrb[0].mxu0
        %v816 = vadd.f32 %v728, %v815
        %v817 = vpop.f32.mrb[0].mxu0
        %818 = vmatprep.mubr.bf16.mxu0 0
        %819 = vmatmul.mubr.bf16.gmra.mrb[0].mxu0 %v700
        %v820 = vpop.f32.mrb[0].mxu0
        %v821 = vadd.f32 %v728, %v820
        %v822 = vpop.f32.mrb[0].mxu0
        %v823 = vpop.f32.mrb[0].mxu0
        %v824 = vadd.f32 %v728, %v823
        %v825 = vpop.f32.mrb[0].mxu0
        %826 = vmatprep.mubr.bf16.mxu0 0
        %827 = vmatmul.mubr.bf16.gmra.mrb[0].mxu0 %v701
        %v828 = vpop.f32.mrb[0].mxu0
        %v829 = vadd.f32 %v728, %v828
        %v830 = vpop.f32.mrb[0].mxu0
        %v831 = vpop.f32.mrb[0].mxu0
        %v832 = vadd.f32 %v728, %v831
        %v833 = vpop.f32.mrb[0].mxu0
        %834 = vmatprep.mubr.bf16.mxu0 0
        %835 = vmatmul.mubr.bf16.gmra.mrb[0].mxu0 %v702
        %v836 = vpop.f32.mrb[0].mxu0
        %v837 = vadd.f32 %v728, %v836
        %v838 = vpop.f32.mrb[0].mxu0
        %v839 = vpop.f32.mrb[0].mxu0
        %v840 = vadd.f32 %v728, %v839
        %v841 = vpop.f32.mrb[0].mxu0
        %842 = vmatprep.mubr.bf16.mxu0 0
        %843 = vmatmul.mubr.bf16.gmra.mrb[0].mxu0 %v703
        %v844 = vpop.f32.mrb[0].mxu0
        %v845 = vadd.f32 %v728, %v844
        %v846 = vpop.f32.mrb[0].mxu0
        %v847 = vpop.f32.mrb[0].mxu0
        %v848 = vadd.f32 %v728, %v847
        %v849 = vpop.f32.mrb[0].mxu0
        %850 = vmatprep.mubr.bf16.mxu0 0
        %851 = vmatmul.mubr.bf16.gmra.mrb[0].mxu0 %v704
        %v852 = vpop.f32.mrb[0].mxu0
        %v853 = vadd.f32 %v728, %v852
        %v854 = vpop.f32.mrb[0].mxu0
        %v855 = vpop.f32.mrb[0].mxu0
        %v856 = vadd.f32 %v728, %v855
        %v857 = vpop.f32.mrb[0].mxu0
        %858 = vmatprep.mubr.bf16.mxu0 0
        %859 = vmatmul.mubr.bf16.gmra.mrb[0].mxu0 %v705
        %v860 = vpop.f32.mrb[0].mxu0
        %v861 = vadd.f32 %v728, %v860
        %v862 = vpop.f32.mrb[0].mxu0
        %v863 = vpop.f32.mrb[0].mxu0
        %v864 = vadd.f32 %v728, %v863
        %v865 = vpop.f32.mrb[0].mxu0
        %866 = vmatprep.mubr.bf16.mxu0 0
        %867 = vmatmul.mubr.bf16.gmra.mrb[0].mxu0 %v706
        %v868 = vpop.f32.mrb[0].mxu0
        %v869 = vadd.f32 %v728, %v868
        %v870 = vpop.f32.mrb[0].mxu0
        %v871 = vpop.f32.mrb[0].mxu0
        %v872 = vadd.f32 %v728, %v871
        %v873 = vpop.f32.mrb[0].mxu0
        %874 = vdwg.mxu0
        %v875 = vmax.f32 %v813, 0.0
        %v876 = vmax.f32 %v816, 0.0
        %v877 = vmax.f32 %v821, 0.0
        %v878 = vmax.f32 %v824, 0.0
        %v879 = vmax.f32 %v829, 0.0
        %v880 = vmax.f32 %v832, 0.0
        %v881 = vmax.f32 %v837, 0.0
        %v882 = vmax.f32 %v840, 0.0
        %v883 = vmax.f32 %v845, 0.0
        %v884 = vmax.f32 %v848, 0.0
        %v885 = vmax.f32 %v853, 0.0
        %v886 = vmax.f32 %v856, 0.0
        %v887 = vmax.f32 %v861, 0.0
        %v888 = vmax.f32 %v864, 0.0
        %v889 = vmax.f32 %v869, 0.0
        %v890 = vmax.f32 %v872, 0.0
        %v891 = vpack.c.bf16 %v876, %v875
        %v892 = vpack.c.bf16 %v878, %v877
        %v893 = vpack.c.bf16 %v880, %v879
        %v894 = vpack.c.bf16 %v882, %v881
        %v895 = vpack.c.bf16 %v884, %v883
        %v896 = vpack.c.bf16 %v886, %v885
        %v897 = vpack.c.bf16 %v888, %v887
        %v898 = vpack.c.bf16 %v890, %v889
        %v899 = vld [vmem:[%s5] sm:$0xf]
        %v900 = vld [vmem:[%s5 + $0x4] sm:$0xf]
        %v901 = vld [vmem:[%s5 + $0x8] sm:$0xf]
        %v902 = vld [vmem:[%s5 + $0xc] sm:$0xf]
        %v903 = vld [vmem:[%s5 + $0x10] sm:$0xf]
        %v904 = vld [vmem:[%s5 + $0x14] sm:$0xf]
        %v905 = vld [vmem:[%s5 + $0x18] sm:$0xf]
        %v906 = vld [vmem:[%s5 + $0x1c] sm:$0xf]
        %v907 = vld [vmem:[%s5 + $0x20] sm:$0xf]
        %v908 = vld [vmem:[%s5 + $0x24] sm:$0xf]
        %v909 = vld [vmem:[%s5 + $0x28] sm:$0xf]
        %v910 = vld [vmem:[%s5 + $0x2c] sm:$0xf]
        %v911 = vld [vmem:[%s5 + $0x30] sm:$0xf]
        %v912 = vld [vmem:[%s5 + $0x34] sm:$0xf]
        %v913 = vld [vmem:[%s5 + $0x38] sm:$0xf]
        %v914 = vld [vmem:[%s5 + $0x3c] sm:$0xf]
        %v915 = vld [vmem:[%s6] sm:$0x1]
        %v917 = vlaneseq
        %v918 = vshrl.u32 %v917, 7
        %v919 = vsub.s32 0, %v918
        %v920 = vrot.slane %v915, %v919
        %v938 = vunpack.c.l.b16 %v899
        %v939 = vunpack.c.l.b16 %v900
        %v940 = vunpack.c.l.b16 %v901
        %v941 = vunpack.c.l.b16 %v902
        %v942 = vunpack.c.l.b16 %v903
        %v943 = vunpack.c.l.b16 %v904
        %v944 = vunpack.c.l.b16 %v905
        %v945 = vunpack.c.l.b16 %v906
        %v946 = vunpack.c.l.b16 %v907
        %v947 = vunpack.c.l.b16 %v908
        %v948 = vunpack.c.l.b16 %v909
        %v949 = vunpack.c.l.b16 %v910
        %v950 = vunpack.c.l.b16 %v911
        %v951 = vunpack.c.l.b16 %v912
        %v952 = vunpack.c.l.b16 %v913
        %v953 = vunpack.c.l.b16 %v914
        %v954 = vpack.c.b16 %v939, %v938
        %v955 = vpack.c.b16 %v941, %v940
        %v956 = vpack.c.b16 %v943, %v942
        %v957 = vpack.c.b16 %v945, %v944
        %v958 = vpack.c.b16 %v947, %v946
        %v959 = vpack.c.b16 %v949, %v948
        %v960 = vpack.c.b16 %v951, %v950
        %v961 = vpack.c.b16 %v953, %v952
        %970 = vmatprep.subr.bf16.mxu0 0
        %971 = vmatpush1.bf16.msra.mxu0 %v954
        %972 = vmatprep.subr.bf16.mxu0 0
        %973 = vmatpush1.bf16.msra.mxu0 %v955
        %974 = vmatprep.subr.bf16.mxu0 0
        %975 = vmatpush1.bf16.msra.mxu0 %v956
        %976 = vmatprep.subr.bf16.mxu0 0
        %977 = vmatpush1.bf16.msra.mxu0 %v957
        %978 = vmatprep.subr.bf16.mxu0 0
        %979 = vmatpush1.bf16.msra.mxu0 %v958
        %980 = vmatprep.subr.bf16.mxu0 0
        %981 = vmatpush1.bf16.msra.mxu0 %v959
        %982 = vmatprep.subr.bf16.mxu0 0
        %983 = vmatpush1.bf16.msra.mxu0 %v960
        %984 = vmatprep.subr.bf16.mxu0 0
        %985 = vmatpush1.bf16.msra.mxu0 %v961
        %986 = vmatprep.subr.bf16.mxu0 0
        %987 = vmatpush1.bf16.msra.mxu0 0
        %988 = vmatprep.subr.bf16.mxu0 0
        %989 = vmatpush1.bf16.msra.mxu0 0
        %990 = vmatprep.subr.bf16.mxu0 0
        %991 = vmatpush1.bf16.msra.mxu0 0
        %992 = vmatprep.subr.bf16.mxu0 0
        %993 = vmatpush1.bf16.msra.mxu0 0
        %994 = vmatprep.subr.bf16.mxu0 0
        %995 = vmatpush1.bf16.msra.mxu0 0
        %996 = vmatprep.subr.bf16.mxu0 0
        %997 = vmatpush1.bf16.msra.mxu0 0
        %998 = vmatprep.subr.bf16.mxu0 0
        %999 = vmatpush1.bf16.msra.mxu0 0
        %1000 = vmatprep.subr.bf16.mxu0 0
        %1001 = vmatpush1.bf16.msra.mxu0 0
        %1002 = vmatprep.mubr.bf16.mxu0 0
        %1003 = vmatmul.mubr.bf16.gmra.mrb[0].mxu0 %v891
        %v1004 = vpop.f32.mrb[0].mxu0
        %v1005 = vadd.f32 %v920, %v1004
        %v1006 = vpop.f32.mrb[0].mxu0
        %v1007 = vpop.f32.mrb[0].mxu0
        %v1008 = vadd.f32 %v920, %v1007
        %v1009 = vpop.f32.mrb[0].mxu0
        %1010 = vmatprep.mubr.bf16.mxu0 0
        %1011 = vmatmul.mubr.bf16.gmra.mrb[0].mxu0 %v892
        %v1012 = vpop.f32.mrb[0].mxu0
        %v1013 = vadd.f32 %v920, %v1012
        %v1014 = vpop.f32.mrb[0].mxu0
        %v1015 = vpop.f32.mrb[0].mxu0
        %v1016 = vadd.f32 %v920, %v1015
        %v1017 = vpop.f32.mrb[0].mxu0
        %1018 = vmatprep.mubr.bf16.mxu0 0
        %1019 = vmatmul.mubr.bf16.gmra.mrb[0].mxu0 %v893
        %v1020 = vpop.f32.mrb[0].mxu0
        %v1021 = vadd.f32 %v920, %v1020
        %v1022 = vpop.f32.mrb[0].mxu0
        %v1023 = vpop.f32.mrb[0].mxu0
        %v1024 = vadd.f32 %v920, %v1023
        %v1025 = vpop.f32.mrb[0].mxu0
        %1026 = vmatprep.mubr.bf16.mxu0 0
        %1027 = vmatmul.mubr.bf16.gmra.mrb[0].mxu0 %v894
        %v1028 = vpop.f32.mrb[0].mxu0
        %v1029 = vadd.f32 %v920, %v1028
        %v1030 = vpop.f32.mrb[0].mxu0
        %v1031 = vpop.f32.mrb[0].mxu0
        %v1032 = vadd.f32 %v920, %v1031
        %v1033 = vpop.f32.mrb[0].mxu0
        %1034 = vmatprep.mubr.bf16.mxu0 0
        %1035 = vmatmul.mubr.bf16.gmra.mrb[0].mxu0 %v895
        %v1036 = vpop.f32.mrb[0].mxu0
        %v1037 = vadd.f32 %v920, %v1036
        %v1038 = vpop.f32.mrb[0].mxu0
        %v1039 = vpop.f32.mrb[0].mxu0
        %v1040 = vadd.f32 %v920, %v1039
        %v1041 = vpop.f32.mrb[0].mxu0
        %1042 = vmatprep.mubr.bf16.mxu0 0
        %1043 = vmatmul.mubr.bf16.gmra.mrb[0].mxu0 %v896
        %v1044 = vpop.f32.mrb[0].mxu0
        %v1045 = vadd.f32 %v920, %v1044
        %v1046 = vpop.f32.mrb[0].mxu0
        %v1047 = vpop.f32.mrb[0].mxu0
        %v1048 = vadd.f32 %v920, %v1047
        %v1049 = vpop.f32.mrb[0].mxu0
        %1050 = vmatprep.mubr.bf16.mxu0 0
        %1051 = vmatmul.mubr.bf16.gmra.mrb[0].mxu0 %v897
        %v1052 = vpop.f32.mrb[0].mxu0
        %v1053 = vadd.f32 %v920, %v1052
        %v1054 = vpop.f32.mrb[0].mxu0
        %v1055 = vpop.f32.mrb[0].mxu0
        %v1056 = vadd.f32 %v920, %v1055
        %v1057 = vpop.f32.mrb[0].mxu0
        %1058 = vmatprep.mubr.bf16.mxu0 0
        %1059 = vmatmul.mubr.bf16.gmra.mrb[0].mxu0 %v898
        %v1060 = vpop.f32.mrb[0].mxu0
        %v1061 = vadd.f32 %v920, %v1060
        %v1062 = vpop.f32.mrb[0].mxu0
        %v1063 = vpop.f32.mrb[0].mxu0
        %v1064 = vadd.f32 %v920, %v1063
        %v1065 = vpop.f32.mrb[0].mxu0
        %1066 = vdwg.mxu0
        %v1067 = vmax.f32 %v1005, 0.0
        %v1068 = vmax.f32 %v1008, 0.0
        %v1069 = vmax.f32 %v1013, 0.0
        %v1070 = vmax.f32 %v1016, 0.0
        %v1071 = vmax.f32 %v1021, 0.0
        %v1072 = vmax.f32 %v1024, 0.0
        %v1073 = vmax.f32 %v1029, 0.0
        %v1074 = vmax.f32 %v1032, 0.0
        %v1075 = vmax.f32 %v1037, 0.0
        %v1076 = vmax.f32 %v1040, 0.0
        %v1077 = vmax.f32 %v1045, 0.0
        %v1078 = vmax.f32 %v1048, 0.0
        %v1079 = vmax.f32 %v1053, 0.0
        %v1080 = vmax.f32 %v1056, 0.0
        %v1081 = vmax.f32 %v1061, 0.0
        %v1082 = vmax.f32 %v1064, 0.0
        %v1083 = vpack.c.bf16 %v1068, %v1067
        %v1084 = vpack.c.bf16 %v1070, %v1069
        %v1085 = vpack.c.bf16 %v1072, %v1071
        %v1086 = vpack.c.bf16 %v1074, %v1073
        %v1087 = vpack.c.bf16 %v1076, %v1075
        %v1088 = vpack.c.bf16 %v1078, %v1077
        %v1089 = vpack.c.bf16 %v1080, %v1079
        %v1090 = vpack.c.bf16 %v1082, %v1081
        %v1091 = vld [vmem:[%s7] sm:$0xf]
        %v1092 = vld [vmem:[%s7 + $0x4] sm:$0xf]
        %v1093 = vld [vmem:[%s7 + $0x8] sm:$0xf]
        %v1094 = vld [vmem:[%s7 + $0xc] sm:$0xf]
        %v1095 = vld [vmem:[%s7 + $0x10] sm:$0xf]
        %v1096 = vld [vmem:[%s7 + $0x14] sm:$0xf]
        %v1097 = vld [vmem:[%s7 + $0x18] sm:$0xf]
        %v1098 = vld [vmem:[%s7 + $0x1c] sm:$0xf]
        %v1099 = vld [vmem:[%s7 + $0x20] sm:$0xf]
        %v1100 = vld [vmem:[%s7 + $0x24] sm:$0xf]
        %v1101 = vld [vmem:[%s7 + $0x28] sm:$0xf]
        %v1102 = vld [vmem:[%s7 + $0x2c] sm:$0xf]
        %v1103 = vld [vmem:[%s7 + $0x30] sm:$0xf]
        %v1104 = vld [vmem:[%s7 + $0x34] sm:$0xf]
        %v1105 = vld [vmem:[%s7 + $0x38] sm:$0xf]
        %v1106 = vld [vmem:[%s7 + $0x3c] sm:$0xf]
        %v1107 = vld [vmem:[%s8] sm:$0x1]
        %v1109 = vlaneseq
        %v1110 = vshrl.u32 %v1109, 7
        %v1111 = vsub.s32 0, %v1110
        %v1112 = vrot.slane %v1107, %v1111
        %v1130 = vunpack.c.l.b16 %v1091
        %v1131 = vunpack.c.l.b16 %v1092
        %v1132 = vunpack.c.l.b16 %v1093
        %v1133 = vunpack.c.l.b16 %v1094
        %v1134 = vunpack.c.l.b16 %v1095
        %v1135 = vunpack.c.l.b16 %v1096
        %v1136 = vunpack.c.l.b16 %v1097
        %v1137 = vunpack.c.l.b16 %v1098
        %v1138 = vunpack.c.l.b16 %v1099
        %v1139 = vunpack.c.l.b16 %v1100
        %v1140 = vunpack.c.l.b16 %v1101
        %v1141 = vunpack.c.l.b16 %v1102
        %v1142 = vunpack.c.l.b16 %v1103
        %v1143 = vunpack.c.l.b16 %v1104
        %v1144 = vunpack.c.l.b16 %v1105
        %v1145 = vunpack.c.l.b16 %v1106
        %v1146 = vpack.c.b16 %v1131, %v1130
        %v1147 = vpack.c.b16 %v1133, %v1132
        %v1148 = vpack.c.b16 %v1135, %v1134
        %v1149 = vpack.c.b16 %v1137, %v1136
        %v1150 = vpack.c.b16 %v1139, %v1138
        %v1151 = vpack.c.b16 %v1141, %v1140
        %v1152 = vpack.c.b16 %v1143, %v1142
        %v1153 = vpack.c.b16 %v1145, %v1144
        %1162 = vmatprep.subr.bf16.mxu0 0
        %1163 = vmatpush1.bf16.msra.mxu0 %v1146
        %1164 = vmatprep.subr.bf16.mxu0 0
        %1165 = vmatpush1.bf16.msra.mxu0 %v1147
        %1166 = vmatprep.subr.bf16.mxu0 0
        %1167 = vmatpush1.bf16.msra.mxu0 %v1148
        %1168 = vmatprep.subr.bf16.mxu0 0
        %1169 = vmatpush1.bf16.msra.mxu0 %v1149
        %1170 = vmatprep.subr.bf16.mxu0 0
        %1171 = vmatpush1.bf16.msra.mxu0 %v1150
        %1172 = vmatprep.subr.bf16.mxu0 0
        %1173 = vmatpush1.bf16.msra.mxu0 %v1151
        %1174 = vmatprep.subr.bf16.mxu0 0
        %1175 = vmatpush1.bf16.msra.mxu0 %v1152
        %1176 = vmatprep.subr.bf16.mxu0 0
        %1177 = vmatpush1.bf16.msra.mxu0 %v1153
        %1178 = vmatprep.subr.bf16.mxu0 0
        %1179 = vmatpush1.bf16.msra.mxu0 0
        %1180 = vmatprep.subr.bf16.mxu0 0
        %1181 = vmatpush1.bf16.msra.mxu0 0
        %1182 = vmatprep.subr.bf16.mxu0 0
        %1183 = vmatpush1.bf16.msra.mxu0 0
        %1184 = vmatprep.subr.bf16.mxu0 0
        %1185 = vmatpush1.bf16.msra.mxu0 0
        %1186 = vmatprep.subr.bf16.mxu0 0
        %1187 = vmatpush1.bf16.msra.mxu0 0
        %1188 = vmatprep.subr.bf16.mxu0 0
        %1189 = vmatpush1.bf16.msra.mxu0 0
        %1190 = vmatprep.subr.bf16.mxu0 0
        %1191 = vmatpush1.bf16.msra.mxu0 0
        %1192 = vmatprep.subr.bf16.mxu0 0
        %1193 = vmatpush1.bf16.msra.mxu0 0
        %1194 = vmatprep.mubr.bf16.mxu0 0
        %1195 = vmatmul.mubr.bf16.gmra.mrb[0].mxu0 %v1083
        %v1196 = vpop.f32.mrb[0].mxu0
        %v1197 = vadd.f32 %v1112, %v1196
        %v1198 = vpop.f32.mrb[0].mxu0
        %v1199 = vpop.f32.mrb[0].mxu0
        %v1200 = vadd.f32 %v1112, %v1199
        %v1201 = vpop.f32.mrb[0].mxu0
        %1202 = vmatprep.mubr.bf16.mxu0 0
        %1203 = vmatmul.mubr.bf16.gmra.mrb[0].mxu0 %v1084
        %v1204 = vpop.f32.mrb[0].mxu0
        %v1205 = vadd.f32 %v1112, %v1204
        %v1206 = vpop.f32.mrb[0].mxu0
        %v1207 = vpop.f32.mrb[0].mxu0
        %v1208 = vadd.f32 %v1112, %v1207
        %v1209 = vpop.f32.mrb[0].mxu0
        %1210 = vmatprep.mubr.bf16.mxu0 0
        %1211 = vmatmul.mubr.bf16.gmra.mrb[0].mxu0 %v1085
        %v1212 = vpop.f32.mrb[0].mxu0
        %v1213 = vadd.f32 %v1112, %v1212
        %v1214 = vpop.f32.mrb[0].mxu0
        %v1215 = vpop.f32.mrb[0].mxu0
        %v1216 = vadd.f32 %v1112, %v1215
        %v1217 = vpop.f32.mrb[0].mxu0
        %1218 = vmatprep.mubr.bf16.mxu0 0
        %1219 = vmatmul.mubr.bf16.gmra.mrb[0].mxu0 %v1086
        %v1220 = vpop.f32.mrb[0].mxu0
        %v1221 = vadd.f32 %v1112, %v1220
        %v1222 = vpop.f32.mrb[0].mxu0
        %v1223 = vpop.f32.mrb[0].mxu0
        %v1224 = vadd.f32 %v1112, %v1223
        %v1225 = vpop.f32.mrb[0].mxu0
        %1226 = vmatprep.mubr.bf16.mxu0 0
        %1227 = vmatmul.mubr.bf16.gmra.mrb[0].mxu0 %v1087
        %v1228 = vpop.f32.mrb[0].mxu0
        %v1229 = vadd.f32 %v1112, %v1228
        %v1230 = vpop.f32.mrb[0].mxu0
        %v1231 = vpop.f32.mrb[0].mxu0
        %v1232 = vadd.f32 %v1112, %v1231
        %v1233 = vpop.f32.mrb[0].mxu0
        %1234 = vmatprep.mubr.bf16.mxu0 0
        %1235 = vmatmul.mubr.bf16.gmra.mrb[0].mxu0 %v1088
        %v1236 = vpop.f32.mrb[0].mxu0
        %v1237 = vadd.f32 %v1112, %v1236
        %v1238 = vpop.f32.mrb[0].mxu0
        %v1239 = vpop.f32.mrb[0].mxu0
        %v1240 = vadd.f32 %v1112, %v1239
        %v1241 = vpop.f32.mrb[0].mxu0
        %1242 = vmatprep.mubr.bf16.mxu0 0
        %1243 = vmatmul.mubr.bf16.gmra.mrb[0].mxu0 %v1089
        %v1244 = vpop.f32.mrb[0].mxu0
        %v1245 = vadd.f32 %v1112, %v1244
        %v1246 = vpop.f32.mrb[0].mxu0
        %v1247 = vpop.f32.mrb[0].mxu0
        %v1248 = vadd.f32 %v1112, %v1247
        %v1249 = vpop.f32.mrb[0].mxu0
        %1250 = vmatprep.mubr.bf16.mxu0 0
        %1251 = vmatmul.mubr.bf16.gmra.mrb[0].mxu0 %v1090
        %v1252 = vpop.f32.mrb[0].mxu0
        %v1253 = vadd.f32 %v1112, %v1252
        %v1254 = vpop.f32.mrb[0].mxu0
        %v1255 = vpop.f32.mrb[0].mxu0
        %v1256 = vadd.f32 %v1112, %v1255
        %v1257 = vpop.f32.mrb[0].mxu0
        %1258 = vdwg.mxu0
        %v1259 = vmax.f32 %v1197, 0.0
        %v1260 = vmax.f32 %v1200, 0.0
        %v1261 = vmax.f32 %v1205, 0.0
        %v1262 = vmax.f32 %v1208, 0.0
        %v1263 = vmax.f32 %v1213, 0.0
        %v1264 = vmax.f32 %v1216, 0.0
        %v1265 = vmax.f32 %v1221, 0.0
        %v1266 = vmax.f32 %v1224, 0.0
        %v1267 = vmax.f32 %v1229, 0.0
        %v1268 = vmax.f32 %v1232, 0.0
        %v1269 = vmax.f32 %v1237, 0.0
        %v1270 = vmax.f32 %v1240, 0.0
        %v1271 = vmax.f32 %v1245, 0.0
        %v1272 = vmax.f32 %v1248, 0.0
        %v1273 = vmax.f32 %v1253, 0.0
        %v1274 = vmax.f32 %v1256, 0.0
        %v1275 = vpack.c.bf16 %v1260, %v1259
        %v1276 = vpack.c.bf16 %v1262, %v1261
        %v1277 = vpack.c.bf16 %v1264, %v1263
        %v1278 = vpack.c.bf16 %v1266, %v1265
        %v1279 = vpack.c.bf16 %v1268, %v1267
        %v1280 = vpack.c.bf16 %v1270, %v1269
        %v1281 = vpack.c.bf16 %v1272, %v1271
        %v1282 = vpack.c.bf16 %v1274, %v1273
        %v1283 = vld [vmem:[#allocation2] sm:$0xf]
        %v1284 = vld [vmem:[#allocation2 + $0x4] sm:$0xf]
        %v1285 = vld [vmem:[#allocation2 + $0x8] sm:$0xf]
        %v1286 = vld [vmem:[#allocation2 + $0xc] sm:$0xf]
        %v1287 = vld [vmem:[#allocation2 + $0x10] sm:$0xf]
        %v1288 = vld [vmem:[#allocation2 + $0x14] sm:$0xf]
        %v1289 = vld [vmem:[#allocation2 + $0x18] sm:$0xf]
        %v1290 = vld [vmem:[#allocation2 + $0x1c] sm:$0xf]
        %v1291 = vld [vmem:[#allocation2 + $0x20] sm:$0xf]
        %v1292 = vld [vmem:[#allocation2 + $0x24] sm:$0xf]
        %v1293 = vld [vmem:[#allocation2 + $0x28] sm:$0xf]
        %v1294 = vld [vmem:[#allocation2 + $0x2c] sm:$0xf]
        %v1295 = vld [vmem:[#allocation2 + $0x30] sm:$0xf]
        %v1296 = vld [vmem:[#allocation2 + $0x34] sm:$0xf]
        %v1297 = vld [vmem:[#allocation2 + $0x38] sm:$0xf]
        %v1298 = vld [vmem:[#allocation2 + $0x3c] sm:$0xf]
        %v1299 = vld [vmem:[%s10] sm:$0x1]
        %v1301 = vlaneseq
        %v1302 = vshrl.u32 %v1301, 7
        %v1303 = vsub.s32 0, %v1302
        %v1304 = vrot.slane %v1299, %v1303
        %v1322 = vunpack.c.l.b16 %v1283
        %v1323 = vunpack.c.l.b16 %v1284
        %v1324 = vunpack.c.l.b16 %v1285
        %v1325 = vunpack.c.l.b16 %v1286
        %v1326 = vunpack.c.l.b16 %v1287
        %v1327 = vunpack.c.l.b16 %v1288
        %v1328 = vunpack.c.l.b16 %v1289
        %v1329 = vunpack.c.l.b16 %v1290
        %v1330 = vunpack.c.l.b16 %v1291
        %v1331 = vunpack.c.l.b16 %v1292
        %v1332 = vunpack.c.l.b16 %v1293
        %v1333 = vunpack.c.l.b16 %v1294
        %v1334 = vunpack.c.l.b16 %v1295
        %v1335 = vunpack.c.l.b16 %v1296
        %v1336 = vunpack.c.l.b16 %v1297
        %v1337 = vunpack.c.l.b16 %v1298
        %v1338 = vpack.c.b16 %v1323, %v1322
        %v1339 = vpack.c.b16 %v1325, %v1324
        %v1340 = vpack.c.b16 %v1327, %v1326
        %v1341 = vpack.c.b16 %v1329, %v1328
        %v1342 = vpack.c.b16 %v1331, %v1330
        %v1343 = vpack.c.b16 %v1333, %v1332
        %v1344 = vpack.c.b16 %v1335, %v1334
        %v1345 = vpack.c.b16 %v1337, %v1336
        %1354 = vmatprep.subr.bf16.mxu0 0
        %1355 = vmatpush1.bf16.msra.mxu0 %v1338
        %1356 = vmatprep.subr.bf16.mxu0 0
        %1357 = vmatpush1.bf16.msra.mxu0 %v1339
        %1358 = vmatprep.subr.bf16.mxu0 0
        %1359 = vmatpush1.bf16.msra.mxu0 %v1340
        %1360 = vmatprep.subr.bf16.mxu0 0
        %1361 = vmatpush1.bf16.msra.mxu0 %v1341
        %1362 = vmatprep.subr.bf16.mxu0 0
        %1363 = vmatpush1.bf16.msra.mxu0 %v1342
        %1364 = vmatprep.subr.bf16.mxu0 0
        %1365 = vmatpush1.bf16.msra.mxu0 %v1343
        %1366 = vmatprep.subr.bf16.mxu0 0
        %1367 = vmatpush1.bf16.msra.mxu0 %v1344
        %1368 = vmatprep.subr.bf16.mxu0 0
        %1369 = vmatpush1.bf16.msra.mxu0 %v1345
        %1370 = vmatprep.subr.bf16.mxu0 0
        %1371 = vmatpush1.bf16.msra.mxu0 0
        %1372 = vmatprep.subr.bf16.mxu0 0
        %1373 = vmatpush1.bf16.msra.mxu0 0
        %1374 = vmatprep.subr.bf16.mxu0 0
        %1375 = vmatpush1.bf16.msra.mxu0 0
        %1376 = vmatprep.subr.bf16.mxu0 0
        %1377 = vmatpush1.bf16.msra.mxu0 0
        %1378 = vmatprep.subr.bf16.mxu0 0
        %1379 = vmatpush1.bf16.msra.mxu0 0
        %1380 = vmatprep.subr.bf16.mxu0 0
        %1381 = vmatpush1.bf16.msra.mxu0 0
        %1382 = vmatprep.subr.bf16.mxu0 0
        %1383 = vmatpush1.bf16.msra.mxu0 0
        %1384 = vmatprep.subr.bf16.mxu0 0
        %1385 = vmatpush1.bf16.msra.mxu0 0
        %1386 = vmatprep.mubr.bf16.mxu0 0
        %1387 = vmatmul.mubr.bf16.gmra.mrb[0].mxu0 %v1275
        %v1388 = vpop.f32.mrb[0].mxu0
        %v1389 = vadd.f32 %v1304, %v1388
        %v1390 = vpop.f32.mrb[0].mxu0
        %v1391 = vpop.f32.mrb[0].mxu0
        %v1392 = vadd.f32 %v1304, %v1391
        %v1393 = vpop.f32.mrb[0].mxu0
        %1394 = vmatprep.mubr.bf16.mxu0 0
        %1395 = vmatmul.mubr.bf16.gmra.mrb[0].mxu0 %v1276
        %v1396 = vpop.f32.mrb[0].mxu0
        %v1397 = vadd.f32 %v1304, %v1396
        %v1398 = vpop.f32.mrb[0].mxu0
        %v1399 = vpop.f32.mrb[0].mxu0
        %v1400 = vadd.f32 %v1304, %v1399
        %v1401 = vpop.f32.mrb[0].mxu0
        %1402 = vmatprep.mubr.bf16.mxu0 0
        %1403 = vmatmul.mubr.bf16.gmra.mrb[0].mxu0 %v1277
        %v1404 = vpop.f32.mrb[0].mxu0
        %v1405 = vadd.f32 %v1304, %v1404
        %v1406 = vpop.f32.mrb[0].mxu0
        %v1407 = vpop.f32.mrb[0].mxu0
        %v1408 = vadd.f32 %v1304, %v1407
        %v1409 = vpop.f32.mrb[0].mxu0
        %1410 = vmatprep.mubr.bf16.mxu0 0
        %1411 = vmatmul.mubr.bf16.gmra.mrb[0].mxu0 %v1278
        %v1412 = vpop.f32.mrb[0].mxu0
        %v1413 = vadd.f32 %v1304, %v1412
        %v1414 = vpop.f32.mrb[0].mxu0
        %v1415 = vpop.f32.mrb[0].mxu0
        %v1416 = vadd.f32 %v1304, %v1415
        %v1417 = vpop.f32.mrb[0].mxu0
        %1418 = vmatprep.mubr.bf16.mxu0 0
        %1419 = vmatmul.mubr.bf16.gmra.mrb[0].mxu0 %v1279
        %v1420 = vpop.f32.mrb[0].mxu0
        %v1421 = vadd.f32 %v1304, %v1420
        %v1422 = vpop.f32.mrb[0].mxu0
        %v1423 = vpop.f32.mrb[0].mxu0
        %v1424 = vadd.f32 %v1304, %v1423
        %v1425 = vpop.f32.mrb[0].mxu0
        %1426 = vmatprep.mubr.bf16.mxu0 0
        %1427 = vmatmul.mubr.bf16.gmra.mrb[0].mxu0 %v1280
        %v1428 = vpop.f32.mrb[0].mxu0
        %v1429 = vadd.f32 %v1304, %v1428
        %v1430 = vpop.f32.mrb[0].mxu0
        %v1431 = vpop.f32.mrb[0].mxu0
        %v1432 = vadd.f32 %v1304, %v1431
        %v1433 = vpop.f32.mrb[0].mxu0
        %1434 = vmatprep.mubr.bf16.mxu0 0
        %1435 = vmatmul.mubr.bf16.gmra.mrb[0].mxu0 %v1281
        %v1436 = vpop.f32.mrb[0].mxu0
        %v1437 = vadd.f32 %v1304, %v1436
        %v1438 = vpop.f32.mrb[0].mxu0
        %v1439 = vpop.f32.mrb[0].mxu0
        %v1440 = vadd.f32 %v1304, %v1439
        %v1441 = vpop.f32.mrb[0].mxu0
        %1442 = vmatprep.mubr.bf16.mxu0 0
        %1443 = vmatmul.mubr.bf16.gmra.mrb[0].mxu0 %v1282
        %v1444 = vpop.f32.mrb[0].mxu0
        %v1445 = vadd.f32 %v1304, %v1444
        %v1446 = vpop.f32.mrb[0].mxu0
        %v1447 = vpop.f32.mrb[0].mxu0
        %v1448 = vadd.f32 %v1304, %v1447
        %v1449 = vpop.f32.mrb[0].mxu0
        %1450 = vdwg.mxu0
        %v1451 = vmax.f32 %v1389, 0.0
        %v1452 = vmax.f32 %v1392, 0.0
        %v1453 = vmax.f32 %v1397, 0.0
        %v1454 = vmax.f32 %v1400, 0.0
        %v1455 = vmax.f32 %v1405, 0.0
        %v1456 = vmax.f32 %v1408, 0.0
        %v1457 = vmax.f32 %v1413, 0.0
        %v1458 = vmax.f32 %v1416, 0.0
        %v1459 = vmax.f32 %v1421, 0.0
        %v1460 = vmax.f32 %v1424, 0.0
        %v1461 = vmax.f32 %v1429, 0.0
        %v1462 = vmax.f32 %v1432, 0.0
        %v1463 = vmax.f32 %v1437, 0.0
        %v1464 = vmax.f32 %v1440, 0.0
        %v1465 = vmax.f32 %v1445, 0.0
        %v1466 = vmax.f32 %v1448, 0.0
        %v1467 = vpack.c.bf16 %v1452, %v1451
        %v1468 = vpack.c.bf16 %v1454, %v1453
        %v1469 = vpack.c.bf16 %v1456, %v1455
        %v1470 = vpack.c.bf16 %v1458, %v1457
        %v1471 = vpack.c.bf16 %v1460, %v1459
        %v1472 = vpack.c.bf16 %v1462, %v1461
        %v1473 = vpack.c.bf16 %v1464, %v1463
        %v1474 = vpack.c.bf16 %v1466, %v1465
        %v1475 = vld [vmem:[#allocation4] sm:$0xf]
        %v1476 = vld [vmem:[#allocation4 + $0x4] sm:$0xf]
        %v1477 = vld [vmem:[#allocation4 + $0x8] sm:$0xf]
        %v1478 = vld [vmem:[#allocation4 + $0xc] sm:$0xf]
        %v1479 = vld [vmem:[#allocation4 + $0x10] sm:$0xf]
        %v1480 = vld [vmem:[#allocation4 + $0x14] sm:$0xf]
        %v1481 = vld [vmem:[#allocation4 + $0x18] sm:$0xf]
        %v1482 = vld [vmem:[#allocation4 + $0x1c] sm:$0xf]
        %v1483 = vld [vmem:[#allocation4 + $0x20] sm:$0xf]
        %v1484 = vld [vmem:[#allocation4 + $0x24] sm:$0xf]
        %v1485 = vld [vmem:[#allocation4 + $0x28] sm:$0xf]
        %v1486 = vld [vmem:[#allocation4 + $0x2c] sm:$0xf]
        %v1487 = vld [vmem:[#allocation4 + $0x30] sm:$0xf]
        %v1488 = vld [vmem:[#allocation4 + $0x34] sm:$0xf]
        %v1489 = vld [vmem:[#allocation4 + $0x38] sm:$0xf]
        %v1490 = vld [vmem:[#allocation4 + $0x3c] sm:$0xf]
        %v1491 = vld [vmem:[#allocation6] sm:$0x1]
        %v1493 = vlaneseq
        %v1494 = vshrl.u32 %v1493, 7
        %v1495 = vsub.s32 0, %v1494
        %v1496 = vrot.slane %v1491, %v1495
        %v1514 = vunpack.c.l.b16 %v1475
        %v1515 = vunpack.c.l.b16 %v1476
        %v1516 = vunpack.c.l.b16 %v1477
        %v1517 = vunpack.c.l.b16 %v1478
        %v1518 = vunpack.c.l.b16 %v1479
        %v1519 = vunpack.c.l.b16 %v1480
        %v1520 = vunpack.c.l.b16 %v1481
        %v1521 = vunpack.c.l.b16 %v1482
        %v1522 = vunpack.c.l.b16 %v1483
        %v1523 = vunpack.c.l.b16 %v1484
        %v1524 = vunpack.c.l.b16 %v1485
        %v1525 = vunpack.c.l.b16 %v1486
        %v1526 = vunpack.c.l.b16 %v1487
        %v1527 = vunpack.c.l.b16 %v1488
        %v1528 = vunpack.c.l.b16 %v1489
        %v1529 = vunpack.c.l.b16 %v1490
        %v1530 = vpack.c.b16 %v1515, %v1514
        %v1531 = vpack.c.b16 %v1517, %v1516
        %v1532 = vpack.c.b16 %v1519, %v1518
        %v1533 = vpack.c.b16 %v1521, %v1520
        %v1534 = vpack.c.b16 %v1523, %v1522
        %v1535 = vpack.c.b16 %v1525, %v1524
        %v1536 = vpack.c.b16 %v1527, %v1526
        %v1537 = vpack.c.b16 %v1529, %v1528
        %1546 = vmatprep.subr.bf16.mxu0 0
        %1547 = vmatpush1.bf16.msra.mxu0 %v1530
        %1548 = vmatprep.subr.bf16.mxu0 0
        %1549 = vmatpush1.bf16.msra.mxu0 %v1531
        %1550 = vmatprep.subr.bf16.mxu0 0
        %1551 = vmatpush1.bf16.msra.mxu0 %v1532
        %1552 = vmatprep.subr.bf16.mxu0 0
        %1553 = vmatpush1.bf16.msra.mxu0 %v1533
        %1554 = vmatprep.subr.bf16.mxu0 0
        %1555 = vmatpush1.bf16.msra.mxu0 %v1534
        %1556 = vmatprep.subr.bf16.mxu0 0
        %1557 = vmatpush1.bf16.msra.mxu0 %v1535
        %1558 = vmatprep.subr.bf16.mxu0 0
        %1559 = vmatpush1.bf16.msra.mxu0 %v1536
        %1560 = vmatprep.subr.bf16.mxu0 0
        %1561 = vmatpush1.bf16.msra.mxu0 %v1537
        %1562 = vmatprep.subr.bf16.mxu0 0
        %1563 = vmatpush1.bf16.msra.mxu0 0
        %1564 = vmatprep.subr.bf16.mxu0 0
        %1565 = vmatpush1.bf16.msra.mxu0 0
        %1566 = vmatprep.subr.bf16.mxu0 0
        %1567 = vmatpush1.bf16.msra.mxu0 0
        %1568 = vmatprep.subr.bf16.mxu0 0
        %1569 = vmatpush1.bf16.msra.mxu0 0
        %1570 = vmatprep.subr.bf16.mxu0 0
        %1571 = vmatpush1.bf16.msra.mxu0 0
        %1572 = vmatprep.subr.bf16.mxu0 0
        %1573 = vmatpush1.bf16.msra.mxu0 0
        %1574 = vmatprep.subr.bf16.mxu0 0
        %1575 = vmatpush1.bf16.msra.mxu0 0
        %1576 = vmatprep.subr.bf16.mxu0 0
        %1577 = vmatpush1.bf16.msra.mxu0 0
        %1578 = vmatprep.mubr.bf16.mxu0 0
        %1579 = vmatmul.mubr.bf16.gmra.mrb[0].mxu0 %v1467
        %v1580 = vpop.f32.mrb[0].mxu0
        %v1581 = vadd.f32 %v1496, %v1580
        %v1582 = vpop.f32.mrb[0].mxu0
        %v1583 = vpop.f32.mrb[0].mxu0
        %v1584 = vadd.f32 %v1496, %v1583
        %v1585 = vpop.f32.mrb[0].mxu0
        %1586 = vmatprep.mubr.bf16.mxu0 0
        %1587 = vmatmul.mubr.bf16.gmra.mrb[0].mxu0 %v1468
        %v1588 = vpop.f32.mrb[0].mxu0
        %v1589 = vadd.f32 %v1496, %v1588
        %v1590 = vpop.f32.mrb[0].mxu0
        %v1591 = vpop.f32.mrb[0].mxu0
        %v1592 = vadd.f32 %v1496, %v1591
        %v1593 = vpop.f32.mrb[0].mxu0
        %1594 = vmatprep.mubr.bf16.mxu0 0
        %1595 = vmatmul.mubr.bf16.gmra.mrb[0].mxu0 %v1469
        %v1596 = vpop.f32.mrb[0].mxu0
        %v1597 = vadd.f32 %v1496, %v1596
        %v1598 = vpop.f32.mrb[0].mxu0
        %v1599 = vpop.f32.mrb[0].mxu0
        %v1600 = vadd.f32 %v1496, %v1599
        %v1601 = vpop.f32.mrb[0].mxu0
        %1602 = vmatprep.mubr.bf16.mxu0 0
        %1603 = vmatmul.mubr.bf16.gmra.mrb[0].mxu0 %v1470
        %v1604 = vpop.f32.mrb[0].mxu0
        %v1605 = vadd.f32 %v1496, %v1604
        %v1606 = vpop.f32.mrb[0].mxu0
        %v1607 = vpop.f32.mrb[0].mxu0
        %v1608 = vadd.f32 %v1496, %v1607
        %v1609 = vpop.f32.mrb[0].mxu0
        %1610 = vmatprep.mubr.bf16.mxu0 0
        %1611 = vmatmul.mubr.bf16.gmra.mrb[0].mxu0 %v1471
        %v1612 = vpop.f32.mrb[0].mxu0
        %v1613 = vadd.f32 %v1496, %v1612
        %v1614 = vpop.f32.mrb[0].mxu0
        %v1615 = vpop.f32.mrb[0].mxu0
        %v1616 = vadd.f32 %v1496, %v1615
        %v1617 = vpop.f32.mrb[0].mxu0
        %1618 = vmatprep.mubr.bf16.mxu0 0
        %1619 = vmatmul.mubr.bf16.gmra.mrb[0].mxu0 %v1472
        %v1620 = vpop.f32.mrb[0].mxu0
        %v1621 = vadd.f32 %v1496, %v1620
        %v1622 = vpop.f32.mrb[0].mxu0
        %v1623 = vpop.f32.mrb[0].mxu0
        %v1624 = vadd.f32 %v1496, %v1623
        %v1625 = vpop.f32.mrb[0].mxu0
        %1626 = vmatprep.mubr.bf16.mxu0 0
        %1627 = vmatmul.mubr.bf16.gmra.mrb[0].mxu0 %v1473
        %v1628 = vpop.f32.mrb[0].mxu0
        %v1629 = vadd.f32 %v1496, %v1628
        %v1630 = vpop.f32.mrb[0].mxu0
        %v1631 = vpop.f32.mrb[0].mxu0
        %v1632 = vadd.f32 %v1496, %v1631
        %v1633 = vpop.f32.mrb[0].mxu0
        %1634 = vmatprep.mubr.bf16.mxu0 0
        %1635 = vmatmul.mubr.bf16.gmra.mrb[0].mxu0 %v1474
        %v1636 = vpop.f32.mrb[0].mxu0
        %v1637 = vadd.f32 %v1496, %v1636
        %v1638 = vpop.f32.mrb[0].mxu0
        %v1639 = vpop.f32.mrb[0].mxu0
        %v1640 = vadd.f32 %v1496, %v1639
        %v1641 = vpop.f32.mrb[0].mxu0
        %1642 = vdwg.mxu0
        %1643 = vst [vmem:[%s484] sm:$0xff] %v1581
        %1644 = vst [vmem:[%s484 + $0x8] sm:$0xff] %v1584
        %1645 = vst [vmem:[%s484 + $0x10] sm:$0xff] %v1589
        %1646 = vst [vmem:[%s484 + $0x18] sm:$0xff] %v1592
        %1647 = vst [vmem:[%s484 + $0x20] sm:$0xff] %v1597
        %1648 = vst [vmem:[%s484 + $0x28] sm:$0xff] %v1600
        %1649 = vst [vmem:[%s484 + $0x30] sm:$0xff] %v1605
        %1650 = vst [vmem:[%s484 + $0x38] sm:$0xff] %v1608
        %1651 = vst [vmem:[%s484 + $0x40] sm:$0xff] %v1613
        %1652 = vst [vmem:[%s484 + $0x48] sm:$0xff] %v1616
        %1653 = vst [vmem:[%s484 + $0x50] sm:$0xff] %v1621
        %1654 = vst [vmem:[%s484 + $0x58] sm:$0xff] %v1624
        %1655 = vst [vmem:[%s484 + $0x60] sm:$0xff] %v1629
        %1656 = vst [vmem:[%s484 + $0x68] sm:$0xff] %v1632
        %1657 = vst [vmem:[%s484 + $0x70] sm:$0xff] %v1637
        %1658 = vst [vmem:[%s484 + $0x78] sm:$0xff] %v1640
        %s1659 = smul.u32 16, %s26
        %p1660 = scmp.lt.s32.totalorder %s1659, 31
        %s1661 = scalar_select %p1660, %s1659, 31
        %s1662 = smul.addr %s1661, 8
        %s1663 = scalar_lea.vmem %s13, %s1662
        // Predicated region
        $region85: #{generic_block_forward.1} parent=71 // pred_check
          %p1664 = pneg %p322
        $region86: #{generic_block_forward.1} parent=71 // pred_check_branch
          %1666 = sbr.rel (%p1664) target = $region88
        $region87: #{generic_block_forward.1} parent=71 // pred_region
          %s1667 = smul.u32 16, %s26
        $region88: #{generic_block_forward.1} parent=71 // pred_fallthru
          _
      $region72: #{generic_block_forward.1} parent=5 // pred_fallthru
        _
      %p1668 = scmp.le.s32.totalorder 2, %s21
      // Predicated region
      $region89: #{generic_block_forward.1} parent=5 // pred_check
        %p1669 = pneg %p1668
      $region90: #{generic_block_forward.1} parent=5 // pred_check_branch
        %1671 = sbr.rel (%p1669) target = $region92
      $region91: #{generic_block_forward.1} parent=5 // pred_region
        %s1672 = ssub.s32 %s21, 2
        // Predicated region
        $region93: #{generic_block_forward.1} parent=91 // pred_check
          %p1673 = pneg %p328
        $region94: #{generic_block_forward.1} parent=91 // pred_check_branch
          %1675 = sbr.rel (%p1673) target = $region96
        $region95: #{generic_block_forward.1} parent=91 // pred_region
          %s1676 = smul.u32 16, %s27
          %p1677 = scmp.lt.s32.totalorder %s1676, 31
          %s1678 = scalar_select %p1677, %s1676, 31
          %s1679 = smul.addr %s1678, 8
          %s1680 = scalar_lea.vmem %s13, %s1679
        $region96: #{generic_block_forward.1} parent=91 // pred_fallthru
          _
      $region92: #{generic_block_forward.1} parent=5 // pred_fallthru
        _
    $region6: #{generic_block_forward.1} parent=1 // loop_footer
      %s25 = sadd.s32 1, %s21
    $region7: #{generic_block_forward.1} parent=1 // loop_footer_branch
      %20 = sbr.rel target = $region3
    $region8: #{generic_block_forward.1} parent=1 // loop_exit
      _
    %1681 = vsyncpa [#allocation3], 1
    %s1682 = scalar_lea.sflag [#allocation3], 1
    %1683 = vsyncpa %s1682, 1
    %1684 = vsyncpa [#allocation5], 1

</llo_original>
